<compile_context>
chip_gen: v7x
topology: tpu7x:2x2x1
jax: 0.10.0
libtpu: 0.0.40
codegen_flags: <defaults>
</compile_context>

<pallas_src>
import functools
import math

import jax
import jax.numpy as jnp
from jax.experimental import pallas as pl
from jax.experimental.pallas import tpu as pltpu

EPS = 1e-5          # YatNMN default epsilon
LANE = 128          # TPU vreg lane width
SUBLANE = 8         # f32 sublane count


# --------------------------------------------------------------------------
# Kernel
# --------------------------------------------------------------------------
def _yat_kernel(scale_ref, x_ref, w_ref, wsq_ref, o_ref, dot_acc, xsq_acc,
                *, approx_recip):
    """One (batch tile, feature chunk) step of the Yat linear layer.

    scale_ref : SMEM (1,)          f32       (sqrt(N)/log1p(N))**alpha
    x_ref     : VMEM (TB, TK)      f32/bf16  flattened input chunk
    w_ref     : VMEM (Npad, TK)    f32/bf16  weight chunk (padded classes = 0)
    wsq_ref   : VMEM (1, Npad)     f32       per-class ||w||^2 (full D)
    o_ref     : VMEM (TB, Npad)    f32       output logits (padded classes -> 0)
    dot_acc   : VMEM (TB, Npad)    f32       scratch: x.w accumulator over K
    xsq_acc   : VMEM (TB, 1)       f32       scratch: ||x||^2 accumulator over K
    """
    k = pl.program_id(1)

    @pl.when(k == 0)
    def _():
        dot_acc[...] = jnp.zeros_like(dot_acc)
        xsq_acc[...] = jnp.zeros_like(xsq_acc)

    x = x_ref[...]                                        # (TB, TK)
    w = w_ref[...]                                        # (Npad, TK)

    # MXU: contract the feature dims (last of both operands); f32 accumulation.
    dot_acc[...] += jax.lax.dot_general(
        x, w, (((1,), (1,)), ((), ())),
        preferred_element_type=jnp.float32)               # (TB, Npad)

    # Row-norm partial sums in f32 (chunked over D when K > 1).
    xf = x.astype(jnp.float32)
    xsq_acc[...] += jnp.sum(xf * xf, axis=-1, keepdims=True)

    @pl.when(k == pl.num_programs(1) - 1)
    def _():
        dot = dot_acc[...]
        # ||x - w||^2 = ||x||^2 + ||w||^2 - 2 x.w
        # NOTE: cancellation could make this slightly negative in pathological
        # cases; the PyTorch formula does not clamp, so neither do we.
        dist = xsq_acc[...] + wsq_ref[...] - 2.0 * dot
        if approx_recip:
            inv = pl.reciprocal(dist + EPS, approx=True)    # EUP slot, free-ish
        else:
            inv = pl.reciprocal(dist + EPS, approx=False)   # keeps 1e-5 accuracy
        y = (dot * dot) * inv
        o_ref[...] = (y * scale_ref[0]).astype(o_ref.dtype)


# --------------------------------------------------------------------------
# Planning helpers
# --------------------------------------------------------------------------
def _vmem_cap_bytes():
    """Generation-aware usable-VMEM cap (leaves headroom below physical)."""
    phys = None
    try:
        info = pltpu.get_tpu_info()
        phys = getattr(info, "vmem_capacity_bytes", None)
    except Exception:
        phys = None
    if not isinstance(phys, int) or phys < (32 << 20):
        phys = 64 << 20                       # conservative: v7x per-TC VMEM
    return min(int(phys * 0.85), phys - (8 << 20))


def _need_bytes(tb, tk, ksteps, n_pad, itm):
    """VMEM bytes for one batch-tile pipeline configuration."""
    w_bufs = 1 if ksteps == 1 else 2          # single-buffer the resident weight
    return (2 * tb * tk * itm                 # double-buffered x tiles
            + w_bufs * n_pad * tk * itm       # weight block(s)
            + n_pad * 4                       # ||w||^2 (single-buffered)
            + 2 * tb * n_pad * 4              # double-buffered output tiles
            + tb * n_pad * 4                  # dot accumulator scratch
            + tb * LANE * 4)                  # x_sq scratch (lane-padded)


def _plan_tiles(B, D, n_pad, itm, cap):
    """Pick (batch_tile, feature_tile) filling the VMEM budget.

    Keeps >= 2 grid steps along batch (when B allows) so the parallel axis can
    shard across v7x's two TensorCores and the x-tile DMA pipelines.
    """
    # Feature-axis candidates: full D (K=1, weight resident), else multiples of
    # 128 that divide D (K>1, weight streamed).  Largest fitting wins.
    tk_cands = [D] + sorted(
        (t for t in range(LANE, D, LANE) if D % t == 0), reverse=True)
    tk = tk_cands[-1]
    for cand in tk_cands:
        if _need_bytes(SUBLANE, cand, D // cand, n_pad, itm) <= cap:
            tk = cand
            break
    ksteps = D // tk

    if B > SUBLANE:
        tb_grid_cap = max(SUBLANE, ((B + 1) // 2) // SUBLANE * SUBLANE)
    else:
        tb_grid_cap = SUBLANE
    tb_cap = min(1024, tb_grid_cap)

    tb = SUBLANE
    t = tb_cap
    while t >= SUBLANE:
        if _need_bytes(t, tk, ksteps, n_pad, itm) <= cap:
            tb = t
            break
        t -= SUBLANE
    return tb, tk


# --------------------------------------------------------------------------
# Parameter preparation (do ONCE; persist across forward calls)
# --------------------------------------------------------------------------
def prepare_yat_params(weight, alpha, *, use_bf16_mxu=False):
    """Hoist the padded weight, per-class ||w||^2 and alpha scale.

    weight : (N, D)  PyTorch-layout YatNMN weight
    alpha  : (1,)    learnable scalar (init 1.0)
    use_bf16_mxu : cast MXU operands to bf16 (halves x/w DMA bytes); changes
                   numerics vs the f32 PyTorch reference.
    """
    N, D = weight.shape
    io_dtype = (jnp.bfloat16
                if (weight.dtype == jnp.bfloat16 or use_bf16_mxu)
                else jnp.float32)

    # Lane-dense class dim: pad to a multiple of 128 with zero rows so output
    # stores are unmasked vst; padded classes produce exact zeros.
    n_pad = max(LANE, ((N + LANE - 1) // LANE) * LANE)
    w_pad = jnp.zeros((n_pad, D), dtype=io_dtype)
    w_pad = w_pad.at[:N, :].set(weight.astype(io_dtype))

    w_f32 = weight.astype(jnp.float32)
    w_sq = jnp.zeros((1, n_pad), dtype=jnp.float32)
    w_sq = w_sq.at[0, :N].set(jnp.sum(w_f32 * w_f32, axis=-1))

    n_f = jnp.float32(N)                                   # true N, not padded
    scale = (jnp.sqrt(n_f) / jnp.log1p(n_f)) ** alpha.astype(jnp.float32)  # (1,)

    return dict(w_pad=w_pad, w_sq=w_sq, scale=scale,
                num_classes=N, io_dtype=io_dtype)


# --------------------------------------------------------------------------
# Forward
# --------------------------------------------------------------------------
def yat_classifier_forward(x, params, *, batch_tile=None,
                           single_buffer_const=True, approx_reciprocal=False):
    """Forward pass of SingleLayerYatClassifier.

    x      : (B, ...) any shape; flattened to (B, D) like x.view(B, -1)
    params : output of prepare_yat_params (padded weight, ||w||^2, scale)
    """
    w_pad, w_sq, scale = params["w_pad"], params["w_sq"], params["scale"]
    N, io_dtype = params["num_classes"], params["io_dtype"]
    n_pad, D = w_pad.shape

    B = x.shape[0]
    x2 = x.reshape(B, -1).astype(io_dtype)                 # (B, D)
    assert x2.shape[1] == D, (x2.shape, w_pad.shape)

    itm = jnp.dtype(io_dtype).itemsize
    cap = _vmem_cap_bytes()
    tb, tk = _plan_tiles(B, D, n_pad, itm, cap)
    if batch_tile is not None:
        tb = ((batch_tile + SUBLANE - 1) // SUBLANE) * SUBLANE
    ksteps = D // tk

    # Pad the batch to a multiple of the tile (padded rows give 0 logits).
    b_pad = pl.cdiv(B, tb) * tb
    if b_pad != B:
        x2 = jnp.pad(x2, ((0, b_pad - B), (0, 0)))

    # Always pass a vmem limit (v5e scoped default is only 16 MiB), capped at a
    # generation-aware ceiling.
    need = _need_bytes(tb, tk, ksteps, n_pad, itm)
    vmem_limit = max(1 << 20, min(int(need * 1.3) + (2 << 20), cap))

    # Constant-index blocks: single-buffer so the resident weight isn't doubled.
    if ksteps == 1 and single_buffer_const:
        w_spec = pl.BlockSpec((n_pad, tk), lambda i, k: (0, 0),
                              pipeline_mode=pl.Buffered(1))
    else:
        w_spec = pl.BlockSpec((n_pad, tk), lambda i, k: (0, k))
    if single_buffer_const:
        wsq_spec = pl.BlockSpec((1, n_pad), lambda i, k: (0, 0),
                                pipeline_mode=pl.Buffered(1))
    else:
        wsq_spec = pl.BlockSpec((1, n_pad), lambda i, k: (0, 0))

    out = pl.pallas_call(
        functools.partial(_yat_kernel, approx_recip=approx_reciprocal),
        out_shape=jax.ShapeDtypeStruct((b_pad, n_pad), jnp.float32),
        grid_spec=pltpu.PrefetchScalarGridSpec(
            num_scalar_prefetch=0,
            grid=(b_pad // tb, ksteps),
            in_specs=[
                pl.BlockSpec(memory_space=pltpu.MemorySpace.SMEM),  # scale
                pl.BlockSpec((tb, tk), lambda i, k: (i, k)),        # x tile
                w_spec,                                             # weight
                wsq_spec,                                           # ||w||^2
            ],
            out_specs=pl.BlockSpec((tb, n_pad), lambda i, k: (i, 0)),
            scratch_shapes=[
                pltpu.VMEM((tb, n_pad), jnp.float32),               # dot acc
                pltpu.VMEM((tb, 1), jnp.float32),                   # ||x||^2 acc
            ],
        ),
        compiler_params=pltpu.CompilerParams(
            dimension_semantics=("parallel", "arbitrary"),
            vmem_limit_bytes=vmem_limit,
        ),
    )(scale, x2, w_pad, w_sq)

    return out[:B, :N]                                     # drop padding


# --------------------------------------------------------------------------
# Pure-JAX reference
# --------------------------------------------------------------------------
def _reference(x, weight, alpha):
    B = x.shape[0]
    x2 = x.reshape(B, -1).astype(jnp.float32)
    w = weight.astype(jnp.float32)
    dot = x2 @ w.T
    dist = (jnp.sum(x2 * x2, axis=-1, keepdims=True)
            + jnp.sum(w * w, axis=-1)[None, :]
            - 2.0 * dot)
    y = dot * dot / (dist + EPS)
    n = float(weight.shape[0])
    scale = (math.sqrt(n) / math.log1p(n)) ** alpha.astype(jnp.float32)[0]
    return y * scale


if __name__ == "__main__":
    key = jax.random.PRNGKey(0)
    kx, kw = jax.random.split(key)

    # Module default: input_size = 784 (1x28x28), 10 classes.
    B, C, H, W = 32, 1, 28, 28
    num_classes = 10
    D = C * H * W

    x = jax.random.normal(kx, (B, C, H, W), dtype=jnp.float32)

    bound = math.sqrt(6.0 / (D + num_classes))     # xavier_uniform_ init
    weight = jax.random.uniform(
        kw, (num_classes, D), minval=-bound, maxval=bound, dtype=jnp.float32)
    # bias=False in this module; alpha is a learnable scalar initialised to 1.
    alpha = jnp.ones((1,), dtype=jnp.float32)

    # Hoisted once -- padded weight, ||w||^2, alpha scale persist across calls.
    params = jax.tree_util.tree_map(jax.block_until_ready,
                                    prepare_yat_params(weight, alpha))

    try:
        out = yat_classifier_forward(x, params)
    except Exception:
        # Fallback if this JAX build rejects single-buffered constant blocks.
        out = yat_classifier_forward(x, params, single_buffer_const=False)
    out = jax.block_until_ready(out)

    ref = _reference(x, weight, alpha)
    assert out.shape == (B, num_classes), out.shape
    assert jnp.allclose(out, ref, rtol=1e-5, atol=1e-5), float(
        jnp.max(jnp.abs(out - ref)))

    print("KERNEL_OK")
</pallas_src>

<mosaic_0001>
module attributes {stable_mosaic.version = 11 : i64} {
  func.func @_yat_kernel(%arg0: i32, %arg1: i32, %arg2: memref<1xf32, #tpu.memory_space<smem>>, %arg3: memref<16x784xf32, #tpu.memory_space<vmem>>, %arg4: memref<128x784xf32, #tpu.memory_space<vmem>>, %arg5: memref<1x128xf32, #tpu.memory_space<vmem>>, %arg6: memref<16x128xf32, #tpu.memory_space<vmem>>, %arg7: memref<16x128xf32, #tpu.memory_space<vmem>>, %arg8: memref<16x1xf32, #tpu.memory_space<vmem>>) attributes {dimension_semantics = [#tpu.dimension_semantics<parallel>, #tpu.dimension_semantics<arbitrary>], iteration_bounds = array<i64: 2, 1>, scalar_prefetch = 0 : i64, scratch_operands = 2 : i64, tpu.core_type = #tpu.core_type<tc>, window_params = [{transform_indices = @transform_0, window_bounds = array<i64: 1>}, {transform_indices = @transform_1, window_bounds = array<i64: 16, 784>}, {pipeline_mode = #tpu.pipeline_mode<synchronous>, transform_indices = @transform_2, window_bounds = array<i64: 128, 784>}, {pipeline_mode = #tpu.pipeline_mode<synchronous>, transform_indices = @transform_3, window_bounds = array<i64: 1, 128>}, {transform_indices = @transform_4, window_bounds = array<i64: 16, 128>}]} {
    %c0_i32 = arith.constant 0 : i32
    %0 = arith.cmpi eq, %arg1, %c0_i32 : i32
    %1 = arith.extui %0 : i1 to i32
    %c0_i32_0 = arith.constant 0 : i32
    %2 = arith.cmpi ne, %1, %c0_i32_0 : i32
    scf.if %2 {
      %cst_15 = arith.constant 0.000000e+00 : f32
      %18 = vector.broadcast %cst_15 : f32 to vector<16x128xf32>
      %c0_16 = arith.constant 0 : index
      %c0_17 = arith.constant 0 : index
      %19 = vector.load %arg7[%c0_16, %c0_17] : memref<16x128xf32, #tpu.memory_space<vmem>>, vector<16x128xf32>
      tpu.vector_store %arg7[%c0_16, %c0_17], %18 {strides = array<i32>} : memref<16x128xf32, #tpu.memory_space<vmem>>, vector<16x128xf32>,
      %cst_18 = arith.constant 0.000000e+00 : f32
      %20 = vector.broadcast %cst_18 : f32 to vector<16x1xf32>
      %c0_19 = arith.constant 0 : index
      %c0_20 = arith.constant 0 : index
      %21 = vector.load %arg8[%c0_19, %c0_20] : memref<16x1xf32, #tpu.memory_space<vmem>>, vector<16x1xf32>
      tpu.vector_store %arg8[%c0_19, %c0_20], %20 {strides = array<i32>} : memref<16x1xf32, #tpu.memory_space<vmem>>, vector<16x1xf32>,
    } else {
    }
    %c0 = arith.constant 0 : index
    %c0_1 = arith.constant 0 : index
    %3 = vector.load %arg3[%c0, %c0_1] : memref<16x784xf32, #tpu.memory_space<vmem>>, vector<16x784xf32>
    %c0_2 = arith.constant 0 : index
    %c0_3 = arith.constant 0 : index
    %4 = vector.load %arg4[%c0_2, %c0_3] : memref<128x784xf32, #tpu.memory_space<vmem>>, vector<128x784xf32>
    %c0_4 = arith.constant 0 : index
    %c0_5 = arith.constant 0 : index
    %5 = vector.load %arg7[%c0_4, %c0_5] : memref<16x128xf32, #tpu.memory_space<vmem>>, vector<16x128xf32>
    %cst = arith.constant dense<0.000000e+00> : vector<16x128xf32>
    %6 = tpu.matmul %3, %4, %cst {dimension_numbers = #tpu.dot_dimension_numbers<[1], [1], [0], [0], [0, 0, 1, 0], [], []>} : vector<16x784xf32>, vector<128x784xf32>, vector<16x128xf32> -> vector<16x128xf32>
    %7 = arith.addf %5, %6 : vector<16x128xf32>
    %c0_6 = arith.constant 0 : index
    %c0_7 = arith.constant 0 : index
    %8 = vector.load %arg7[%c0_6, %c0_7] : memref<16x128xf32, #tpu.memory_space<vmem>>, vector<16x128xf32>
    tpu.vector_store %arg7[%c0_6, %c0_7], %7 {strides = array<i32>} : memref<16x128xf32, #tpu.memory_space<vmem>>, vector<16x128xf32>,
    %c0_8 = arith.constant 0 : index
    %c0_9 = arith.constant 0 : index
    %9 = vector.load %arg8[%c0_8, %c0_9] : memref<16x1xf32, #tpu.memory_space<vmem>>, vector<16x1xf32>
    %10 = arith.mulf %3, %3 : vector<16x784xf32>
    %cst_10 = arith.constant dense<0.000000e+00> : vector<16xf32>
    %11 = vector.multi_reduction <add>, %10, %cst_10 [1] : vector<16x784xf32> to vector<16xf32>
    %12 = vector.shape_cast %11 : vector<16xf32> to vector<16x1xf32>
    %13 = arith.addf %9, %12 : vector<16x1xf32>
    %c0_11 = arith.constant 0 : index
    %c0_12 = arith.constant 0 : index
    %14 = vector.load %arg8[%c0_11, %c0_12] : memref<16x1xf32, #tpu.memory_space<vmem>>, vector<16x1xf32>
    tpu.vector_store %arg8[%c0_11, %c0_12], %13 {strides = array<i32>} : memref<16x1xf32, #tpu.memory_space<vmem>>, vector<16x1xf32>,
    %c0_i32_13 = arith.constant 0 : i32
    %15 = arith.cmpi eq, %arg1, %c0_i32_13 : i32
    %16 = arith.extui %15 : i1 to i32
    %c0_i32_14 = arith.constant 0 : i32
    %17 = arith.cmpi ne, %16, %c0_i32_14 : i32
    scf.if %17 {
      %c0_15 = arith.constant 0 : index
      %c0_16 = arith.constant 0 : index
      %18 = vector.load %arg7[%c0_15, %c0_16] : memref<16x128xf32, #tpu.memory_space<vmem>>, vector<16x128xf32>
      %c0_17 = arith.constant 0 : index
      %c0_18 = arith.constant 0 : index
      %19 = vector.load %arg8[%c0_17, %c0_18] : memref<16x1xf32, #tpu.memory_space<vmem>>, vector<16x1xf32>
      %c0_19 = arith.constant 0 : index
      %c0_20 = arith.constant 0 : index
      %20 = vector.load %arg5[%c0_19, %c0_20] : memref<1x128xf32, #tpu.memory_space<vmem>>, vector<1x128xf32>
      %21 = vector.broadcast %19 : vector<16x1xf32> to vector<16x128xf32>
      %22 = vector.broadcast %20 : vector<1x128xf32> to vector<16x128xf32>
      %23 = arith.addf %21, %22 : vector<16x128xf32>
      %cst_21 = arith.constant 2.000000e+00 : f32
      %24 = vector.broadcast %cst_21 : f32 to vector<16x128xf32>
      %25 = arith.mulf %24, %18 : vector<16x128xf32>
      %26 = arith.subf %23, %25 : vector<16x128xf32>
      %cst_22 = arith.constant 9.99999974E-6 : f32
      %27 = vector.broadcast %cst_22 : f32 to vector<16x128xf32>
      %28 = arith.addf %26, %27 : vector<16x128xf32>
      %29 = tpu.reciprocal %28 : vector<16x128xf32> -> vector<16x128xf32>
      %30 = arith.mulf %18, %18 : vector<16x128xf32>
      %31 = arith.mulf %30, %29 : vector<16x128xf32>
      %c0_23 = arith.constant 0 : index
      %32 = memref.load %arg2[%c0_23] : memref<1xf32, #tpu.memory_space<smem>>
      %33 = vector.broadcast %32 : f32 to vector<16x128xf32>
      %34 = arith.mulf %31, %33 : vector<16x128xf32>
      %c0_24 = arith.constant 0 : index
      %c0_25 = arith.constant 0 : index
      %35 = vector.load %arg6[%c0_24, %c0_25] : memref<16x128xf32, #tpu.memory_space<vmem>>, vector<16x128xf32>
      tpu.vector_store %arg6[%c0_24, %c0_25], %34 {strides = array<i32>} : memref<16x128xf32, #tpu.memory_space<vmem>>, vector<16x128xf32>,
    } else {
    }
    return
  }
  func.func @transform_0(%arg0: i32, %arg1: i32) -> i32 {
    %c0_i32 = arith.constant 0 : i32
    %c0_i32_0 = arith.constant 0 : i32
    return %c0_i32 : i32
  }
  func.func @transform_1(%arg0: i32, %arg1: i32) -> (i32, i32) {
    %c0_i32 = arith.constant 0 : i32
    return %arg0, %arg1 : i32, i32
  }
  func.func @transform_2(%arg0: i32, %arg1: i32) -> (i32, i32) {
    %c0_i32 = arith.constant 0 : i32
    %c0_i32_0 = arith.constant 0 : i32
    %c0_i32_1 = arith.constant 0 : i32
    return %c0_i32, %c0_i32_0 : i32, i32
  }
  func.func @transform_3(%arg0: i32, %arg1: i32) -> (i32, i32) {
    %c0_i32 = arith.constant 0 : i32
    %c0_i32_0 = arith.constant 0 : i32
    %c0_i32_1 = arith.constant 0 : i32
    return %c0_i32, %c0_i32_0 : i32, i32
  }
  func.func @transform_4(%arg0: i32, %arg1: i32) -> (i32, i32) {
    %c0_i32 = arith.constant 0 : i32
    %c0_i32_0 = arith.constant 0 : i32
    return %arg0, %c0_i32 : i32, i32
  }
}

module attributes {stable_mosaic.version = 11 : i64} {
  func.func @_yat_kernel(%arg0: i32, %arg1: i32, %arg2: memref<1xf32, #tpu.memory_space<smem>>, %arg3: memref<16x784xf32, #tpu.memory_space<vmem>>, %arg4: memref<128x784xf32, #tpu.memory_space<vmem>>, %arg5: memref<1x128xf32, #tpu.memory_space<vmem>>, %arg6: memref<16x128xf32, #tpu.memory_space<vmem>>, %arg7: memref<16x128xf32, #tpu.memory_space<vmem>>, %arg8: memref<16x1xf32, #tpu.memory_space<vmem>>) attributes {dimension_semantics = [#tpu.dimension_semantics<parallel>, #tpu.dimension_semantics<arbitrary>], iteration_bounds = array<i64: 2, 1>, scalar_prefetch = 0 : i64, scratch_operands = 2 : i64, tpu.core_type = #tpu.core_type<tc>, window_params = [{transform_indices = @transform_0, window_bounds = array<i64: 1>}, {transform_indices = @transform_1, window_bounds = array<i64: 16, 784>}, {transform_indices = @transform_2, window_bounds = array<i64: 128, 784>}, {pipeline_mode = #tpu.pipeline_mode<synchronous>, transform_indices = @transform_3, window_bounds = array<i64: 1, 128>}, {transform_indices = @transform_4, window_bounds = array<i64: 16, 128>}]} {
    %c0_i32 = arith.constant 0 : i32
    %0 = arith.cmpi eq, %arg1, %c0_i32 : i32
    %1 = arith.extui %0 : i1 to i32
    %c0_i32_0 = arith.constant 0 : i32
    %2 = arith.cmpi ne, %1, %c0_i32_0 : i32
    scf.if %2 {
      %cst_15 = arith.constant 0.000000e+00 : f32
      %18 = vector.broadcast %cst_15 : f32 to vector<16x128xf32>
      %c0_16 = arith.constant 0 : index
      %c0_17 = arith.constant 0 : index
      %19 = vector.load %arg7[%c0_16, %c0_17] : memref<16x128xf32, #tpu.memory_space<vmem>>, vector<16x128xf32>
      tpu.vector_store %arg7[%c0_16, %c0_17], %18 {strides = array<i32>} : memref<16x128xf32, #tpu.memory_space<vmem>>, vector<16x128xf32>,
      %cst_18 = arith.constant 0.000000e+00 : f32
      %20 = vector.broadcast %cst_18 : f32 to vector<16x1xf32>
      %c0_19 = arith.constant 0 : index
      %c0_20 = arith.constant 0 : index
      %21 = vector.load %arg8[%c0_19, %c0_20] : memref<16x1xf32, #tpu.memory_space<vmem>>, vector<16x1xf32>
      tpu.vector_store %arg8[%c0_19, %c0_20], %20 {strides = array<i32>} : memref<16x1xf32, #tpu.memory_space<vmem>>, vector<16x1xf32>,
    } else {
    }
    %c0 = arith.constant 0 : index
    %c0_1 = arith.constant 0 : index
    %3 = vector.load %arg3[%c0, %c0_1] : memref<16x784xf32, #tpu.memory_space<vmem>>, vector<16x784xf32>
    %c0_2 = arith.constant 0 : index
    %c0_3 = arith.constant 0 : index
    %4 = vector.load %arg4[%c0_2, %c0_3] : memref<128x784xf32, #tpu.memory_space<vmem>>, vector<128x784xf32>
    %c0_4 = arith.constant 0 : index
    %c0_5 = arith.constant 0 : index
    %5 = vector.load %arg7[%c0_4, %c0_5] : memref<16x128xf32, #tpu.memory_space<vmem>>, vector<16x128xf32>
    %cst = arith.constant dense<0.000000e+00> : vector<16x128xf32>
    %6 = tpu.matmul %3, %4, %cst {dimension_numbers = #tpu.dot_dimension_numbers<[1], [1], [0], [0], [0, 0, 1, 0], [], []>} : vector<16x784xf32>, vector<128x784xf32>, vector<16x128xf32> -> vector<16x128xf32>
    %7 = arith.addf %5, %6 : vector<16x128xf32>
    %c0_6 = arith.constant 0 : index
    %c0_7 = arith.constant 0 : index
    %8 = vector.load %arg7[%c0_6, %c0_7] : memref<16x128xf32, #tpu.memory_space<vmem>>, vector<16x128xf32>
    tpu.vector_store %arg7[%c0_6, %c0_7], %7 {strides = array<i32>} : memref<16x128xf32, #tpu.memory_space<vmem>>, vector<16x128xf32>,
    %c0_8 = arith.constant 0 : index
    %c0_9 = arith.constant 0 : index
    %9 = vector.load %arg8[%c0_8, %c0_9] : memref<16x1xf32, #tpu.memory_space<vmem>>, vector<16x1xf32>
    %10 = arith.mulf %3, %3 : vector<16x784xf32>
    %cst_10 = arith.constant dense<0.000000e+00> : vector<16xf32>
    %11 = vector.multi_reduction <add>, %10, %cst_10 [1] : vector<16x784xf32> to vector<16xf32>
    %12 = vector.shape_cast %11 : vector<16xf32> to vector<16x1xf32>
    %13 = arith.addf %9, %12 : vector<16x1xf32>
    %c0_11 = arith.constant 0 : index
    %c0_12 = arith.constant 0 : index
    %14 = vector.load %arg8[%c0_11, %c0_12] : memref<16x1xf32, #tpu.memory_space<vmem>>, vector<16x1xf32>
    tpu.vector_store %arg8[%c0_11, %c0_12], %13 {strides = array<i32>} : memref<16x1xf32, #tpu.memory_space<vmem>>, vector<16x1xf32>,
    %c0_i32_13 = arith.constant 0 : i32
    %15 = arith.cmpi eq, %arg1, %c0_i32_13 : i32
    %16 = arith.extui %15 : i1 to i32
    %c0_i32_14 = arith.constant 0 : i32
    %17 = arith.cmpi ne, %16, %c0_i32_14 : i32
    scf.if %17 {
      %c0_15 = arith.constant 0 : index
      %c0_16 = arith.constant 0 : index
      %18 = vector.load %arg7[%c0_15, %c0_16] : memref<16x128xf32, #tpu.memory_space<vmem>>, vector<16x128xf32>
      %c0_17 = arith.constant 0 : index
      %c0_18 = arith.constant 0 : index
      %19 = vector.load %arg8[%c0_17, %c0_18] : memref<16x1xf32, #tpu.memory_space<vmem>>, vector<16x1xf32>
      %c0_19 = arith.constant 0 : index
      %c0_20 = arith.constant 0 : index
      %20 = vector.load %arg5[%c0_19, %c0_20] : memref<1x128xf32, #tpu.memory_space<vmem>>, vector<1x128xf32>
      %21 = vector.broadcast %19 : vector<16x1xf32> to vector<16x128xf32>
      %22 = vector.broadcast %20 : vector<1x128xf32> to vector<16x128xf32>
      %23 = arith.addf %21, %22 : vector<16x128xf32>
      %cst_21 = arith.constant 2.000000e+00 : f32
      %24 = vector.broadcast %cst_21 : f32 to vector<16x128xf32>
      %25 = arith.mulf %24, %18 : vector<16x128xf32>
      %26 = arith.subf %23, %25 : vector<16x128xf32>
      %cst_22 = arith.constant 9.99999974E-6 : f32
      %27 = vector.broadcast %cst_22 : f32 to vector<16x128xf32>
      %28 = arith.addf %26, %27 : vector<16x128xf32>
      %29 = tpu.reciprocal %28 : vector<16x128xf32> -> vector<16x128xf32>
      %30 = arith.mulf %18, %18 : vector<16x128xf32>
      %31 = arith.mulf %30, %29 : vector<16x128xf32>
      %c0_23 = arith.constant 0 : index
      %32 = memref.load %arg2[%c0_23] : memref<1xf32, #tpu.memory_space<smem>>
      %33 = vector.broadcast %32 : f32 to vector<16x128xf32>
      %34 = arith.mulf %31, %33 : vector<16x128xf32>
      %c0_24 = arith.constant 0 : index
      %c0_25 = arith.constant 0 : index
      %35 = vector.load %arg6[%c0_24, %c0_25] : memref<16x128xf32, #tpu.memory_space<vmem>>, vector<16x128xf32>
      tpu.vector_store %arg6[%c0_24, %c0_25], %34 {strides = array<i32>} : memref<16x128xf32, #tpu.memory_space<vmem>>, vector<16x128xf32>,
    } else {
    }
    return
  }
  func.func @transform_0(%arg0: i32, %arg1: i32) -> i32 {
    %c0_i32 = arith.constant 0 : i32
    %c0_i32_0 = arith.constant 0 : i32
    return %c0_i32 : i32
  }
  func.func @transform_1(%arg0: i32, %arg1: i32) -> (i32, i32) {
    %c0_i32 = arith.constant 0 : i32
    return %arg0, %arg1 : i32, i32
  }
  func.func @transform_2(%arg0: i32, %arg1: i32) -> (i32, i32) {
    %c0_i32 = arith.constant 0 : i32
    %c0_i32_0 = arith.constant 0 : i32
    return %c0_i32, %arg1 : i32, i32
  }
  func.func @transform_3(%arg0: i32, %arg1: i32) -> (i32, i32) {
    %c0_i32 = arith.constant 0 : i32
    %c0_i32_0 = arith.constant 0 : i32
    %c0_i32_1 = arith.constant 0 : i32
    return %c0_i32, %c0_i32_0 : i32, i32
  }
  func.func @transform_4(%arg0: i32, %arg1: i32) -> (i32, i32) {
    %c0_i32 = arith.constant 0 : i32
    %c0_i32_0 = arith.constant 0 : i32
    return %arg0, %c0_i32 : i32, i32
  }
}

</mosaic_0001>

<llo_original>
// kernel: tpu_custom_call.1
$region0: #{tpu_custom_call.1}
  #allocation0 [shape = 'u32[]', space=smem, size = 0x4, offset = 0x4, fixed_abs, tag = 'smem constant byte address 0x4 - core index']
  #allocation1 [shape = 'u32[144,128]{1,0:T(1,128)}', space=vmem, size = 0x12000, scoped, tag = 'internal scratch']
  #allocation2 [shape = 'f32[16,128]{1,0:T(8,128)}', space=vmem, size = 0x2000, scoped, tag = 'scratch operand']
  #allocation3 [shape = 'f32[16,1]{1,0:T(8,128)}', space=vmem, size = 0x2000, scoped, tag = 'scratch operand']
  #allocation4 [shape = 'f32[1]{0:T(128)S(6)}', space=smem, size = 0x200, scoped, tag = 'scoped memory for tpu_custom_call.1']
  %s0 = inlined_call_operand.<no memory space> [shape: f32[1], index: 0, kind: input, shape index: {}]
  %s1 = inlined_call_operand.vmem [shape: f32[32,784], index: 1, kind: input, shape index: {}]
  %s2 = inlined_call_operand.vmem [shape: f32[128,784], index: 2, kind: input, shape index: {}]
  %s3 = inlined_call_operand.vmem [shape: f32[1,128], index: 3, kind: input, shape index: {}]
  %s4 = inlined_call_operand.hbm [shape: f32[32,128], index: 4, kind: output, shape index: {}]
  %s5 = sld [smem:[#allocation0]]
  $region57: #{tpu_custom_call.1} parent=0
    _
  %s7 = ssub.s32 1, %s5
  %s8 = scalar_select 0, %s7, %s5
  %9 = sst [smem:[#allocation4]] %s0
  $region1: #{tpu_custom_call.1} parent=0
    #allocation5 [shape = 'u8[16384]{0}', space=vmem, size = 0x4000, scoped, tag = 'output window, operand 0']
    #allocation6 [shape = 's32[2]{0}', space=sflag, size = 0x8, scoped, tag = 'scoped memory for tpu_custom_call.1']
    %10 = vsyncpa [#allocation6], 0
    %s11 = scalar_lea.sflag [#allocation6], 1
    %12 = vsyncpa %s11, 0
    loop: start=0, step=1, limit=4
    $region2: #{tpu_custom_call.1} parent=1 // loop_pre_header
      _
    $region3: #{tpu_custom_call.1} parent=1 // loop_header
      %s14 = sphi 0, %s18
      %p15 = scmp.ge.s32.totalorder %s14, 4
      %s21 = sphi 0, %s33
      %s22 = sphi 0, %s29
      %s23 = sphi 0, %s21
      %s24 = sphi 0, %s22
      %s25 = sphi 0, %s23
      %s26 = sphi 0, %s24
      %s34 = sphi 0, %s34
      %s36 = sphi 0, %s34
      %s37 = sphi 0, %s36
      %s51 = sphi 0, %s37
      %s59 = sphi 0, %s61
      %s62 = sphi 0, %s59
      %s63 = sphi 0, %s62
      %s79 = sphi 0, %s63
      %s83 = sphi 0, %s83
      %s85 = sphi 0, %s83
      %s86 = sphi 0, %s85
      %s100 = sphi 0, %s86
      %s104 = sphi 0, %s104
      %s106 = sphi 0, %s104
      %s107 = sphi 0, %s106
      %s121 = sphi 0, %s107
      %s127 = sphi 0, %s129
      %s130 = sphi 0, %s127
      %s131 = sphi 0, %s130
      %s147 = sphi 0, %s131
    $region4: #{tpu_custom_call.1} parent=1 // loop_header_branch
      %17 = sbr.rel (%p15) target = $region8
    $region5: #{tpu_custom_call.1} parent=1 // loop_body
      %s19 = ssub.s32 %s14, 1
      %s20 = ssub.s32 %s14, 2
      %s27 = sadd.s32 1, %s22
      %p28 = scmp.ge.s32.totalorder %s27, 1
      %s29 = scalar_select %p28, 0, %s27
      %s30 = sadd.s32 1, %s21
      %s31 = scalar_select %p28, %s30, %s21
      %p32 = scmp.ge.s32.totalorder %s31, 2
      %s33 = scalar_select %p32, 0, %s31
      %s35 = sadd.s32 %s34, 1
      %p38 = scmp.eq.s32.totalorder %s14, 1
      %p39 = scmp.ne.s32.totalorder %s34, %s36
      %p40 = scmp.eq.s32.totalorder %s14, 0
      %p41 = por %p39, %p40
      %p42 = scmp.ne.s32.totalorder %s34, %s36
      %p43 = scmp.eq.s32.totalorder %s19, 1
      %p44 = por %p42, %p43
      %p45 = scmp.ne.s32.totalorder %s36, %s37
      %p46 = scmp.eq.s32.totalorder %s19, 0
      %p47 = por %p45, %p46
      %p48 = scmp.ne.s32.totalorder %s36, %s37
      %p49 = scmp.eq.s32.totalorder %s20, 1
      %p50 = por %p48, %p49
      %p52 = scmp.ne.s32.totalorder %s37, %s51
      %p53 = scmp.eq.s32.totalorder %s20, 0
      %p54 = por %p52, %p53
      %s55 = ssub.s32 %s21, %s33
      %s56 = ssub.s32 %s22, %s29
      %s57 = sor.u32 %s55, %s56
      %p58 = scmp.eq.s32.totalorder %s57, 0
      %s60 = sadd.s32 %s59, 1
      %s61 = scalar_select %p58, %s59, %s60
      %p64 = pneg %p58
      %p65 = scmp.eq.s32.totalorder %s14, 1
      %p66 = por %p64, %p65
      %p67 = scmp.ne.s32.totalorder %s59, %s62
      %p68 = scmp.eq.s32.totalorder %s14, 0
      %p69 = por %p67, %p68
      %p70 = scmp.ne.s32.totalorder %s59, %s62
      %p71 = scmp.eq.s32.totalorder %s19, 1
      %p72 = por %p70, %p71
      %p73 = scmp.ne.s32.totalorder %s62, %s63
      %p74 = scmp.eq.s32.totalorder %s19, 0
      %p75 = por %p73, %p74
      %p76 = scmp.ne.s32.totalorder %s62, %s63
      %p77 = scmp.eq.s32.totalorder %s20, 1
      %p78 = por %p76, %p77
      %p80 = scmp.ne.s32.totalorder %s63, %s79
      %p81 = scmp.eq.s32.totalorder %s20, 0
      %p82 = por %p80, %p81
      %s84 = sadd.s32 %s83, 1
      %p87 = scmp.eq.s32.totalorder %s14, 1
      %p88 = scmp.ne.s32.totalorder %s83, %s85
      %p89 = scmp.eq.s32.totalorder %s14, 0
      %p90 = por %p88, %p89
      %p91 = scmp.ne.s32.totalorder %s83, %s85
      %p92 = scmp.eq.s32.totalorder %s19, 1
      %p93 = por %p91, %p92
      %p94 = scmp.ne.s32.totalorder %s85, %s86
      %p95 = scmp.eq.s32.totalorder %s19, 0
      %p96 = por %p94, %p95
      %p97 = scmp.ne.s32.totalorder %s85, %s86
      %p98 = scmp.eq.s32.totalorder %s20, 1
      %p99 = por %p97, %p98
      %p101 = scmp.ne.s32.totalorder %s86, %s100
      %p102 = scmp.eq.s32.totalorder %s20, 0
      %p103 = por %p101, %p102
      %s105 = sadd.s32 %s104, 1
      %p108 = scmp.eq.s32.totalorder %s14, 1
      %p109 = scmp.ne.s32.totalorder %s104, %s106
      %p110 = scmp.eq.s32.totalorder %s14, 0
      %p111 = por %p109, %p110
      %p112 = scmp.ne.s32.totalorder %s104, %s106
      %p113 = scmp.eq.s32.totalorder %s19, 1
      %p114 = por %p112, %p113
      %p115 = scmp.ne.s32.totalorder %s106, %s107
      %p116 = scmp.eq.s32.totalorder %s19, 0
      %p117 = por %p115, %p116
      %p118 = scmp.ne.s32.totalorder %s106, %s107
      %p119 = scmp.eq.s32.totalorder %s20, 1
      %p120 = por %p118, %p119
      %p122 = scmp.ne.s32.totalorder %s107, %s121
      %p123 = scmp.eq.s32.totalorder %s20, 0
      %p124 = por %p122, %p123
      %s125 = ssub.s32 %s21, %s33
      %p126 = scmp.eq.s32.totalorder %s125, 0
      %s128 = sadd.s32 %s127, 1
      %s129 = scalar_select %p126, %s127, %s128
      %p132 = pneg %p126
      %p133 = scmp.eq.s32.totalorder %s14, 1
      %p134 = por %p132, %p133
      %p135 = scmp.ne.s32.totalorder %s127, %s130
      %p136 = scmp.eq.s32.totalorder %s14, 0
      %p137 = por %p135, %p136
      %p138 = scmp.ne.s32.totalorder %s127, %s130
      %p139 = scmp.eq.s32.totalorder %s19, 1
      %p140 = por %p138, %p139
      %p141 = scmp.ne.s32.totalorder %s130, %s131
      %p142 = scmp.eq.s32.totalorder %s19, 0
      %p143 = por %p141, %p142
      %p144 = scmp.ne.s32.totalorder %s130, %s131
      %p145 = scmp.eq.s32.totalorder %s20, 1
      %p146 = por %p144, %p145
      %p148 = scmp.ne.s32.totalorder %s131, %s147
      %p149 = scmp.eq.s32.totalorder %s20, 0
      %p150 = por %p148, %p149
      %p151 = scmp.le.s32.totalorder 1, %s14
      %p152 = scmp.lt.s32.totalorder %s14, 3
      %p153 = pnand %p151, %p152
      %p154 = pneg %p153
      // Predicated region
      $region9: #{tpu_custom_call.1} parent=5 // pred_check
        _
      $region10: #{tpu_custom_call.1} parent=5 // pred_check_branch
        %156 = sbr.rel (%p153) target = $region12
      $region11: #{tpu_custom_call.1} parent=5 // pred_region
        %s157 = ssub.s32 %s14, 1
        // Predicated region
        $region13: #{tpu_custom_call.1} parent=11 // pred_check
          %p158 = pneg %p47
        $region14: #{tpu_custom_call.1} parent=11 // pred_check_branch
          %160 = sbr.rel (%p158) target = $region16
        $region15: #{tpu_custom_call.1} parent=11 // pred_region
          _
        $region16: #{tpu_custom_call.1} parent=11 // pred_fallthru
          _
        // Predicated region
        $region17: #{tpu_custom_call.1} parent=11 // pred_check
          %p161 = pneg %p96
        $region18: #{tpu_custom_call.1} parent=11 // pred_check_branch
          %163 = sbr.rel (%p161) target = $region20
        $region19: #{tpu_custom_call.1} parent=11 // pred_region
          _
        $region20: #{tpu_custom_call.1} parent=11 // pred_fallthru
          _
        // Predicated region
        $region21: #{tpu_custom_call.1} parent=11 // pred_check
          %p164 = pneg %p117
        $region22: #{tpu_custom_call.1} parent=11 // pred_check_branch
          %166 = sbr.rel (%p164) target = $region24
        $region23: #{tpu_custom_call.1} parent=11 // pred_region
          _
        $region24: #{tpu_custom_call.1} parent=11 // pred_fallthru
          _
      $region12: #{tpu_custom_call.1} parent=5 // pred_fallthru
        _
      %p167 = scmp.lt.s32.totalorder %s14, 2
      // Predicated region
      $region25: #{tpu_custom_call.1} parent=5 // pred_check
        %p168 = pneg %p167
      $region26: #{tpu_custom_call.1} parent=5 // pred_check_branch
        %170 = sbr.rel (%p168) target = $region28
      $region27: #{tpu_custom_call.1} parent=5 // pred_region
        // Predicated region
        $region29: #{tpu_custom_call.1} parent=27 // pred_check
          %p171 = pneg %p69
        $region30: #{tpu_custom_call.1} parent=27 // pred_check_branch
          %173 = sbr.rel (%p171) target = $region32
        $region31: #{tpu_custom_call.1} parent=27 // pred_region
          %s174 = smul.u32 2, %s21
          %s175 = smul.u32 7, %s22
          %p176 = scmp.lt.s32.totalorder %s174, 3
          %s177 = scalar_select %p176, %s174, 3
          %p178 = scmp.lt.s32.totalorder %s175, 6
          %s179 = scalar_select %p178, %s175, 6
          %s180 = smul.addr %s177, 7
          %s181 = sadd.s32 %s179, %s180
          %s182 = smul.addr %s181, 8
          %s183 = scalar_lea.vmem %s1, %s182
          %s184 = smul.u32 2, %s21
          %s185 = smul.u32 7, %s22
        $region32: #{tpu_custom_call.1} parent=27 // pred_fallthru
          _
      $region28: #{tpu_custom_call.1} parent=5 // pred_fallthru
        _
      %p186 = scmp.le.s32.totalorder 1, %s14
      %p187 = scmp.lt.s32.totalorder %s14, 3
      %p188 = pnand %p186, %p187
      %p189 = pneg %p188
      // Predicated region
      $region33: #{tpu_custom_call.1} parent=5 // pred_check
        _
      $region34: #{tpu_custom_call.1} parent=5 // pred_check_branch
        %191 = sbr.rel (%p188) target = $region36
      $region35: #{tpu_custom_call.1} parent=5 // pred_region
        %s192 = ssub.s32 %s14, 1
        %p193 = pneg %p47
        %p194 = pneg %p44
        %s195 = smul.u32 2, %s23
        %s196 = smul.u32 7, %s24
        %p197 = scmp.lt.s32.totalorder %s195, 3
        %s198 = scalar_select %p197, %s195, 3
        %p199 = scmp.lt.s32.totalorder %s196, 6
        %s200 = scalar_select %p199, %s196, 6
        %s201 = smul.addr %s198, 7
        %s202 = sadd.s32 %s200, %s201
        %s203 = smul.addr %s202, 8
        %s204 = scalar_lea.vmem %s1, %s203
        %p205 = pneg %p75
        %p206 = pneg %p72
        %p207 = pneg %p96
        %p208 = pneg %p93
        %p209 = pneg %p117
        %p210 = pneg %p114
        %p211 = pneg %p143
        %p212 = pneg %p140
        %s213 = sand.u32 %s130, 1
        %s214 = scalar_lea.sflag [#allocation6], %s213
        %s215 = sand.u32 %s130, 1
        %s216 = smul.addr %s215, 16
        %s217 = scalar_lea.vmem [#allocation5], %s216
        %s218 = smul.u32 2, %s23
        %s219 = smul.u32 7, %s24
        %p220 = scmp.lt.s32.totalorder %s218, 3
        %s221 = scalar_select %p220, %s218, 3
        %p222 = scmp.lt.s32.totalorder %s219, 6
        %s223 = scalar_select %p222, %s219, 6
        %s224 = smul.addr %s221, 7
        %s225 = sadd.s32 %s223, %s224
        %s226 = smul.addr %s225, 8
        %s227 = scalar_lea.vmem %s1, %s226
        %s228 = smul.u32 2, %s23
        %s229 = smul.u32 7, %s24
        %s230 = smul.u32 2, %s23
        %p231 = scmp.eq.s32.totalorder %s24, 0
        // Predicated region
        $region37: #{tpu_custom_call.1} parent=35 // pred_check
          %p232 = pneg %p231
        $region38: #{tpu_custom_call.1} parent=35 // pred_check_branch
          %234 = sbr.rel (%p232) target = $region40
        $region39: #{tpu_custom_call.1} parent=35 // pred_region
          %235 = vst [vmem:[#allocation2] sm:$0xff] 0.0
          %236 = vst [vmem:[#allocation2 + $0x8] sm:$0xff] 0.0
          %vm237 = vcmask 7168
          %238 = vst.msk [vmem:[#allocation3] sm:$0xff] %vm237, 0.0
          %239 = vst.msk [vmem:[#allocation3 + $0x8] sm:$0xff] %vm237, 0.0
        $region40: #{tpu_custom_call.1} parent=35 // pred_fallthru
          _
        %v240 = vld [vmem:[%s227] sm:$0xff]
        %v241 = vld [vmem:[%s227 + $0x8] sm:$0xff]
        %v242 = vld [vmem:[%s227 + $0x10] sm:$0xff]
        %v243 = vld [vmem:[%s227 + $0x18] sm:$0xff]
        %v244 = vld [vmem:[%s227 + $0x20] sm:$0xff]
        %v245 = vld [vmem:[%s227 + $0x28] sm:$0xff]
        %v246 = vld [vmem:[%s227 + $0x30] sm:$0xff]
        %v247 = vld [vmem:[%s227 + $0x38] sm:$0xff]
        %v248 = vld [vmem:[%s227 + $0x40] sm:$0xff]
        %v249 = vld [vmem:[%s227 + $0x48] sm:$0xff]
        %v250 = vld [vmem:[%s227 + $0x50] sm:$0xff]
        %v251 = vld [vmem:[%s227 + $0x58] sm:$0xff]
        %v252 = vld [vmem:[%s227 + $0x60] sm:$0xff]
        %v253 = vld [vmem:[%s227 + $0x68] sm:$0xff]
        %v254 = vld [vmem:[%s2] sm:$0xff]
        %v255 = vld [vmem:[%s2 + $0x8] sm:$0xff]
        %v256 = vld [vmem:[%s2 + $0x10] sm:$0xff]
        %v257 = vld [vmem:[%s2 + $0x18] sm:$0xff]
        %v258 = vld [vmem:[%s2 + $0x20] sm:$0xff]
        %v259 = vld [vmem:[%s2 + $0x28] sm:$0xff]
        %v260 = vld [vmem:[%s2 + $0x30] sm:$0xff]
        %v261 = vld [vmem:[%s2 + $0x38] sm:$0xff]
        %v262 = vld [vmem:[%s2 + $0x40] sm:$0xff]
        %v263 = vld [vmem:[%s2 + $0x48] sm:$0xff]
        %v264 = vld [vmem:[%s2 + $0x50] sm:$0xff]
        %v265 = vld [vmem:[%s2 + $0x58] sm:$0xff]
        %v266 = vld [vmem:[%s2 + $0x60] sm:$0xff]
        %v267 = vld [vmem:[%s2 + $0x68] sm:$0xff]
        %v268 = vld [vmem:[%s2 + $0x70] sm:$0xff]
        %v269 = vld [vmem:[%s2 + $0x78] sm:$0xff]
        %v270 = vld [vmem:[%s2 + $0x80] sm:$0xff]
        %v271 = vld [vmem:[%s2 + $0x88] sm:$0xff]
        %v272 = vld [vmem:[%s2 + $0x90] sm:$0xff]
        %v273 = vld [vmem:[%s2 + $0x98] sm:$0xff]
        %v274 = vld [vmem:[%s2 + $0xa0] sm:$0xff]
        %v275 = vld [vmem:[%s2 + $0xa8] sm:$0xff]
        %v276 = vld [vmem:[%s2 + $0xb0] sm:$0xff]
        %v277 = vld [vmem:[%s2 + $0xb8] sm:$0xff]
        %v278 = vld [vmem:[%s2 + $0xc0] sm:$0xff]
        %v279 = vld [vmem:[%s2 + $0xc8] sm:$0xff]
        %v280 = vld [vmem:[%s2 + $0xd0] sm:$0xff]
        %v281 = vld [vmem:[%s2 + $0xd8] sm:$0xff]
        %v282 = vld [vmem:[%s2 + $0xe0] sm:$0xff]
        %v283 = vld [vmem:[%s2 + $0xe8] sm:$0xff]
        %v284 = vld [vmem:[%s2 + $0xf0] sm:$0xff]
        %v285 = vld [vmem:[%s2 + $0xf8] sm:$0xff]
        %v286 = vld [vmem:[%s2 + $0x100] sm:$0xff]
        %v287 = vld [vmem:[%s2 + $0x108] sm:$0xff]
        %v288 = vld [vmem:[%s2 + $0x110] sm:$0xff]
        %v289 = vld [vmem:[%s2 + $0x118] sm:$0xff]
        %v290 = vld [vmem:[%s2 + $0x120] sm:$0xff]
        %v291 = vld [vmem:[%s2 + $0x128] sm:$0xff]
        %v292 = vld [vmem:[%s2 + $0x130] sm:$0xff]
        %v293 = vld [vmem:[%s2 + $0x138] sm:$0xff]
        %v294 = vld [vmem:[%s2 + $0x140] sm:$0xff]
        %v295 = vld [vmem:[%s2 + $0x148] sm:$0xff]
        %v296 = vld [vmem:[%s2 + $0x150] sm:$0xff]
        %v297 = vld [vmem:[%s2 + $0x158] sm:$0xff]
        %v298 = vld [vmem:[%s2 + $0x160] sm:$0xff]
        %v299 = vld [vmem:[%s2 + $0x168] sm:$0xff]
        %v300 = vld [vmem:[%s2 + $0x170] sm:$0xff]
        %v301 = vld [vmem:[%s2 + $0x178] sm:$0xff]
        %v302 = vld [vmem:[%s2 + $0x180] sm:$0xff]
        %v303 = vld [vmem:[%s2 + $0x188] sm:$0xff]
        %v304 = vld [vmem:[%s2 + $0x190] sm:$0xff]
        %v305 = vld [vmem:[%s2 + $0x198] sm:$0xff]
        %v306 = vld [vmem:[%s2 + $0x1a0] sm:$0xff]
        %v307 = vld [vmem:[%s2 + $0x1a8] sm:$0xff]
        %v308 = vld [vmem:[%s2 + $0x1b0] sm:$0xff]
        %v309 = vld [vmem:[%s2 + $0x1b8] sm:$0xff]
        %v310 = vld [vmem:[%s2 + $0x1c0] sm:$0xff]
        %v311 = vld [vmem:[%s2 + $0x1c8] sm:$0xff]
        %v312 = vld [vmem:[%s2 + $0x1d0] sm:$0xff]
        %v313 = vld [vmem:[%s2 + $0x1d8] sm:$0xff]
        %v314 = vld [vmem:[%s2 + $0x1e0] sm:$0xff]
        %v315 = vld [vmem:[%s2 + $0x1e8] sm:$0xff]
        %v316 = vld [vmem:[%s2 + $0x1f0] sm:$0xff]
        %v317 = vld [vmem:[%s2 + $0x1f8] sm:$0xff]
        %v318 = vld [vmem:[%s2 + $0x200] sm:$0xff]
        %v319 = vld [vmem:[%s2 + $0x208] sm:$0xff]
        %v320 = vld [vmem:[%s2 + $0x210] sm:$0xff]
        %v321 = vld [vmem:[%s2 + $0x218] sm:$0xff]
        %v322 = vld [vmem:[%s2 + $0x220] sm:$0xff]
        %v323 = vld [vmem:[%s2 + $0x228] sm:$0xff]
        %v324 = vld [vmem:[%s2 + $0x230] sm:$0xff]
        %v325 = vld [vmem:[%s2 + $0x238] sm:$0xff]
        %v326 = vld [vmem:[%s2 + $0x240] sm:$0xff]
        %v327 = vld [vmem:[%s2 + $0x248] sm:$0xff]
        %v328 = vld [vmem:[%s2 + $0x250] sm:$0xff]
        %v329 = vld [vmem:[%s2 + $0x258] sm:$0xff]
        %v330 = vld [vmem:[%s2 + $0x260] sm:$0xff]
        %v331 = vld [vmem:[%s2 + $0x268] sm:$0xff]
        %v332 = vld [vmem:[%s2 + $0x270] sm:$0xff]
        %v333 = vld [vmem:[%s2 + $0x278] sm:$0xff]
        %v334 = vld [vmem:[%s2 + $0x280] sm:$0xff]
        %v335 = vld [vmem:[%s2 + $0x288] sm:$0xff]
        %v336 = vld [vmem:[%s2 + $0x290] sm:$0xff]
        %v337 = vld [vmem:[%s2 + $0x298] sm:$0xff]
        %v338 = vld [vmem:[%s2 + $0x2a0] sm:$0xff]
        %v339 = vld [vmem:[%s2 + $0x2a8] sm:$0xff]
        %v340 = vld [vmem:[%s2 + $0x2b0] sm:$0xff]
        %v341 = vld [vmem:[%s2 + $0x2b8] sm:$0xff]
        %v342 = vld [vmem:[%s2 + $0x2c0] sm:$0xff]
        %v343 = vld [vmem:[%s2 + $0x2c8] sm:$0xff]
        %v344 = vld [vmem:[%s2 + $0x2d0] sm:$0xff]
        %v345 = vld [vmem:[%s2 + $0x2d8] sm:$0xff]
        %v346 = vld [vmem:[%s2 + $0x2e0] sm:$0xff]
        %v347 = vld [vmem:[%s2 + $0x2e8] sm:$0xff]
        %v348 = vld [vmem:[%s2 + $0x2f0] sm:$0xff]
        %v349 = vld [vmem:[%s2 + $0x2f8] sm:$0xff]
        %v350 = vld [vmem:[%s2 + $0x300] sm:$0xff]
        %v351 = vld [vmem:[%s2 + $0x308] sm:$0xff]
        %v352 = vld [vmem:[%s2 + $0x310] sm:$0xff]
        %v353 = vld [vmem:[%s2 + $0x318] sm:$0xff]
        %v354 = vld [vmem:[%s2 + $0x320] sm:$0xff]
        %v355 = vld [vmem:[%s2 + $0x328] sm:$0xff]
        %v356 = vld [vmem:[%s2 + $0x330] sm:$0xff]
        %v357 = vld [vmem:[%s2 + $0x338] sm:$0xff]
        %v358 = vld [vmem:[%s2 + $0x340] sm:$0xff]
        %v359 = vld [vmem:[%s2 + $0x348] sm:$0xff]
        %v360 = vld [vmem:[%s2 + $0x350] sm:$0xff]
        %v361 = vld [vmem:[%s2 + $0x358] sm:$0xff]
        %v362 = vld [vmem:[%s2 + $0x360] sm:$0xff]
        %v363 = vld [vmem:[%s2 + $0x368] sm:$0xff]
        %v364 = vld [vmem:[%s2 + $0x370] sm:$0xff]
        %v365 = vld [vmem:[%s2 + $0x378] sm:$0xff]
        %v366 = vld [vmem:[#allocation2] sm:$0xff]
        %v367 = vld [vmem:[#allocation2 + $0x8] sm:$0xff]
        %vm368 = vcmask 130048
        %v370 = vsel %vm368, %v246, 0
        %v373 = vsel %vm368, %v253, 0
        %v376 = vsel %vm368, %v260, 0
        %v379 = vsel %vm368, %v267, 0
        %v382 = vsel %vm368, %v274, 0
        %v385 = vsel %vm368, %v281, 0
        %v388 = vsel %vm368, %v288, 0
        %v391 = vsel %vm368, %v295, 0
        %v394 = vsel %vm368, %v302, 0
        %v397 = vsel %vm368, %v309, 0
        %v400 = vsel %vm368, %v316, 0
        %v403 = vsel %vm368, %v323, 0
        %v406 = vsel %vm368, %v330, 0
        %v409 = vsel %vm368, %v337, 0
        %v412 = vsel %vm368, %v344, 0
        %v415 = vsel %vm368, %v351, 0
        %v418 = vsel %vm368, %v358, 0
        %v421 = vsel %vm368, %v365, 0
        %423 = vmatprep.subr.mxu0 %v255
        %424 = vmatpush1.xpose.msra.mxu0 %v254
        %425 = vmatprep.subr.mxu0 %v262
        %426 = vmatpush1.xpose.msra.mxu0 %v261
        %427 = vmatprep.subr.mxu0 %v269
        %428 = vmatpush1.xpose.msra.mxu0 %v268
        %429 = vmatprep.subr.mxu0 %v276
        %430 = vmatpush1.xpose.msra.mxu0 %v275
        %431 = vmatprep.subr.mxu0 %v283
        %432 = vmatpush1.xpose.msra.mxu0 %v282
        %433 = vmatprep.subr.mxu0 %v290
        %434 = vmatpush1.xpose.msra.mxu0 %v289
        %435 = vmatprep.subr.mxu0 %v297
        %436 = vmatpush1.xpose.msra.mxu0 %v296
        %437 = vmatprep.subr.mxu0 %v304
        %438 = vmatpush1.xpose.msra.mxu0 %v303
        %439 = vmatprep.subr.mxu0 %v311
        %440 = vmatpush1.xpose.msra.mxu0 %v310
        %441 = vmatprep.subr.mxu0 %v318
        %442 = vmatpush1.xpose.msra.mxu0 %v317
        %443 = vmatprep.subr.mxu0 %v325
        %444 = vmatpush1.xpose.msra.mxu0 %v324
        %445 = vmatprep.subr.mxu0 %v332
        %446 = vmatpush1.xpose.msra.mxu0 %v331
        %447 = vmatprep.subr.mxu0 %v339
        %448 = vmatpush1.xpose.msra.mxu0 %v338
        %449 = vmatprep.subr.mxu0 %v346
        %450 = vmatpush1.xpose.msra.mxu0 %v345
        %451 = vmatprep.subr.mxu0 %v353
        %452 = vmatpush1.xpose.msra.mxu0 %v352
        %453 = vmatprep.subr.mxu0 %v360
        %454 = vmatpush1.xpose.msra.mxu0 %v359
        %455 = vmatprep.subr.mxu0 0.0
        %456 = vmatpush1.xpose.msra.mxu0 0.0
        %457 = vmatprep.subr.mxu0 0.0
        %458 = vmatpush1.xpose.msra.mxu0 0.0
        %459 = vmatprep.subr.mxu0 0.0
        %460 = vmatpush1.xpose.msra.mxu0 0.0
        %461 = vmatprep.subr.mxu0 0.0
        %462 = vmatpush1.xpose.msra.mxu0 0.0
        %463 = vmatprep.subr.mxu0 0.0
        %464 = vmatpush1.xpose.msra.mxu0 0.0
        %465 = vmatprep.subr.mxu0 0.0
        %466 = vmatpush1.xpose.msra.mxu0 0.0
        %467 = vmatprep.subr.mxu0 0.0
        %468 = vmatpush1.xpose.msra.mxu0 0.0
        %469 = vmatprep.subr.mxu0 0.0
        %470 = vmatpush1.xpose.msra.mxu0 0.0
        %471 = vmatprep.subr.mxu0 0.0
        %472 = vmatpush1.xpose.msra.mxu0 0.0
        %473 = vmatprep.subr.mxu0 0.0
        %474 = vmatpush1.xpose.msra.mxu0 0.0
        %475 = vmatprep.subr.mxu0 0.0
        %476 = vmatpush1.xpose.msra.mxu0 0.0
        %477 = vmatprep.subr.mxu0 0.0
        %478 = vmatpush1.xpose.msra.mxu0 0.0
        %479 = vmatprep.subr.mxu0 0.0
        %480 = vmatpush1.xpose.msra.mxu0 0.0
        %481 = vmatprep.subr.mxu0 0.0
        %482 = vmatpush1.xpose.msra.mxu0 0.0
        %483 = vmatprep.subr.mxu0 0.0
        %484 = vmatpush1.xpose.msra.mxu0 0.0
        %485 = vmatprep.subr.mxu0 0.0
        %486 = vmatpush1.xpose.msra.mxu0 0.0
        %487 = vmatprep.mubr.f32.mxu0 %v241
        %488 = vmatmul.mubr.f32.gmra.mrb[0].mxu0 %v240
        %v489 = vpop.f32.mrb[0].mxu0
        %v490 = vadd.f32 0.0, %v489
        %v491 = vpop.f32.mrb[0].mxu0
        %492 = vmatprep.mubr.f32.mxu0 %v248
        %493 = vmatmul.mubr.f32.gmra.mrb[0].mxu0 %v247
        %v494 = vpop.f32.mrb[0].mxu0
        %v495 = vadd.f32 0.0, %v494
        %v496 = vpop.f32.mrb[0].mxu0
        %497 = vdwg.mxu0
        %498 = vmatprep.subr.mxu0 %v257
        %499 = vmatpush1.xpose.msra.mxu0 %v256
        %500 = vmatprep.subr.mxu0 %v264
        %501 = vmatpush1.xpose.msra.mxu0 %v263
        %502 = vmatprep.subr.mxu0 %v271
        %503 = vmatpush1.xpose.msra.mxu0 %v270
        %504 = vmatprep.subr.mxu0 %v278
        %505 = vmatpush1.xpose.msra.mxu0 %v277
        %506 = vmatprep.subr.mxu0 %v285
        %507 = vmatpush1.xpose.msra.mxu0 %v284
        %508 = vmatprep.subr.mxu0 %v292
        %509 = vmatpush1.xpose.msra.mxu0 %v291
        %510 = vmatprep.subr.mxu0 %v299
        %511 = vmatpush1.xpose.msra.mxu0 %v298
        %512 = vmatprep.subr.mxu0 %v306
        %513 = vmatpush1.xpose.msra.mxu0 %v305
        %514 = vmatprep.subr.mxu0 %v313
        %515 = vmatpush1.xpose.msra.mxu0 %v312
        %516 = vmatprep.subr.mxu0 %v320
        %517 = vmatpush1.xpose.msra.mxu0 %v319
        %518 = vmatprep.subr.mxu0 %v327
        %519 = vmatpush1.xpose.msra.mxu0 %v326
        %520 = vmatprep.subr.mxu0 %v334
        %521 = vmatpush1.xpose.msra.mxu0 %v333
        %522 = vmatprep.subr.mxu0 %v341
        %523 = vmatpush1.xpose.msra.mxu0 %v340
        %524 = vmatprep.subr.mxu0 %v348
        %525 = vmatpush1.xpose.msra.mxu0 %v347
        %526 = vmatprep.subr.mxu0 %v355
        %527 = vmatpush1.xpose.msra.mxu0 %v354
        %528 = vmatprep.subr.mxu0 %v362
        %529 = vmatpush1.xpose.msra.mxu0 %v361
        %530 = vmatprep.subr.mxu0 0.0
        %531 = vmatpush1.xpose.msra.mxu0 0.0
        %532 = vmatprep.subr.mxu0 0.0
        %533 = vmatpush1.xpose.msra.mxu0 0.0
        %534 = vmatprep.subr.mxu0 0.0
        %535 = vmatpush1.xpose.msra.mxu0 0.0
        %536 = vmatprep.subr.mxu0 0.0
        %537 = vmatpush1.xpose.msra.mxu0 0.0
        %538 = vmatprep.subr.mxu0 0.0
        %539 = vmatpush1.xpose.msra.mxu0 0.0
        %540 = vmatprep.subr.mxu0 0.0
        %541 = vmatpush1.xpose.msra.mxu0 0.0
        %542 = vmatprep.subr.mxu0 0.0
        %543 = vmatpush1.xpose.msra.mxu0 0.0
        %544 = vmatprep.subr.mxu0 0.0
        %545 = vmatpush1.xpose.msra.mxu0 0.0
        %546 = vmatprep.subr.mxu0 0.0
        %547 = vmatpush1.xpose.msra.mxu0 0.0
        %548 = vmatprep.subr.mxu0 0.0
        %549 = vmatpush1.xpose.msra.mxu0 0.0
        %550 = vmatprep.subr.mxu0 0.0
        %551 = vmatpush1.xpose.msra.mxu0 0.0
        %552 = vmatprep.subr.mxu0 0.0
        %553 = vmatpush1.xpose.msra.mxu0 0.0
        %554 = vmatprep.subr.mxu0 0.0
        %555 = vmatpush1.xpose.msra.mxu0 0.0
        %556 = vmatprep.subr.mxu0 0.0
        %557 = vmatpush1.xpose.msra.mxu0 0.0
        %558 = vmatprep.subr.mxu0 0.0
        %559 = vmatpush1.xpose.msra.mxu0 0.0
        %560 = vmatprep.subr.mxu0 0.0
        %561 = vmatpush1.xpose.msra.mxu0 0.0
        %562 = vmatprep.mubr.f32.mxu0 %v243
        %563 = vmatmul.mubr.f32.gmra.mrb[0].mxu0 %v242
        %v564 = vpop.f32.mrb[0].mxu0
        %v565 = vadd.f32 %v490, %v564
        %v566 = vpop.f32.mrb[0].mxu0
        %567 = vmatprep.mubr.f32.mxu0 %v250
        %568 = vmatmul.mubr.f32.gmra.mrb[0].mxu0 %v249
        %v569 = vpop.f32.mrb[0].mxu0
        %v570 = vadd.f32 %v495, %v569
        %v571 = vpop.f32.mrb[0].mxu0
        %572 = vdwg.mxu0
        %573 = vmatprep.subr.mxu0 %v259
        %574 = vmatpush1.xpose.msra.mxu0 %v258
        %575 = vmatprep.subr.mxu0 %v266
        %576 = vmatpush1.xpose.msra.mxu0 %v265
        %577 = vmatprep.subr.mxu0 %v273
        %578 = vmatpush1.xpose.msra.mxu0 %v272
        %579 = vmatprep.subr.mxu0 %v280
        %580 = vmatpush1.xpose.msra.mxu0 %v279
        %581 = vmatprep.subr.mxu0 %v287
        %582 = vmatpush1.xpose.msra.mxu0 %v286
        %583 = vmatprep.subr.mxu0 %v294
        %584 = vmatpush1.xpose.msra.mxu0 %v293
        %585 = vmatprep.subr.mxu0 %v301
        %586 = vmatpush1.xpose.msra.mxu0 %v300
        %587 = vmatprep.subr.mxu0 %v308
        %588 = vmatpush1.xpose.msra.mxu0 %v307
        %589 = vmatprep.subr.mxu0 %v315
        %590 = vmatpush1.xpose.msra.mxu0 %v314
        %591 = vmatprep.subr.mxu0 %v322
        %592 = vmatpush1.xpose.msra.mxu0 %v321
        %593 = vmatprep.subr.mxu0 %v329
        %594 = vmatpush1.xpose.msra.mxu0 %v328
        %595 = vmatprep.subr.mxu0 %v336
        %596 = vmatpush1.xpose.msra.mxu0 %v335
        %597 = vmatprep.subr.mxu0 %v343
        %598 = vmatpush1.xpose.msra.mxu0 %v342
        %599 = vmatprep.subr.mxu0 %v350
        %600 = vmatpush1.xpose.msra.mxu0 %v349
        %601 = vmatprep.subr.mxu0 %v357
        %602 = vmatpush1.xpose.msra.mxu0 %v356
        %603 = vmatprep.subr.mxu0 %v364
        %604 = vmatpush1.xpose.msra.mxu0 %v363
        %605 = vmatprep.subr.mxu0 0.0
        %606 = vmatpush1.xpose.msra.mxu0 0.0
        %607 = vmatprep.subr.mxu0 0.0
        %608 = vmatpush1.xpose.msra.mxu0 0.0
        %609 = vmatprep.subr.mxu0 0.0
        %610 = vmatpush1.xpose.msra.mxu0 0.0
        %611 = vmatprep.subr.mxu0 0.0
        %612 = vmatpush1.xpose.msra.mxu0 0.0
        %613 = vmatprep.subr.mxu0 0.0
        %614 = vmatpush1.xpose.msra.mxu0 0.0
        %615 = vmatprep.subr.mxu0 0.0
        %616 = vmatpush1.xpose.msra.mxu0 0.0
        %617 = vmatprep.subr.mxu0 0.0
        %618 = vmatpush1.xpose.msra.mxu0 0.0
        %619 = vmatprep.subr.mxu0 0.0
        %620 = vmatpush1.xpose.msra.mxu0 0.0
        %621 = vmatprep.subr.mxu0 0.0
        %622 = vmatpush1.xpose.msra.mxu0 0.0
        %623 = vmatprep.subr.mxu0 0.0
        %624 = vmatpush1.xpose.msra.mxu0 0.0
        %625 = vmatprep.subr.mxu0 0.0
        %626 = vmatpush1.xpose.msra.mxu0 0.0
        %627 = vmatprep.subr.mxu0 0.0
        %628 = vmatpush1.xpose.msra.mxu0 0.0
        %629 = vmatprep.subr.mxu0 0.0
        %630 = vmatpush1.xpose.msra.mxu0 0.0
        %631 = vmatprep.subr.mxu0 0.0
        %632 = vmatpush1.xpose.msra.mxu0 0.0
        %633 = vmatprep.subr.mxu0 0.0
        %634 = vmatpush1.xpose.msra.mxu0 0.0
        %635 = vmatprep.subr.mxu0 0.0
        %636 = vmatpush1.xpose.msra.mxu0 0.0
        %637 = vmatprep.mubr.f32.mxu0 %v245
        %638 = vmatmul.mubr.f32.gmra.mrb[0].mxu0 %v244
        %v639 = vpop.f32.mrb[0].mxu0
        %v640 = vadd.f32 %v565, %v639
        %v641 = vpop.f32.mrb[0].mxu0
        %642 = vmatprep.mubr.f32.mxu0 %v252
        %643 = vmatmul.mubr.f32.gmra.mrb[0].mxu0 %v251
        %v644 = vpop.f32.mrb[0].mxu0
        %v645 = vadd.f32 %v570, %v644
        %v646 = vpop.f32.mrb[0].mxu0
        %647 = vdwg.mxu0
        %648 = vmatprep.subr.mxu0 0.0
        %649 = vmatpush1.xpose.msra.mxu0 %v376
        %650 = vmatprep.subr.mxu0 0.0
        %651 = vmatpush1.xpose.msra.mxu0 %v379
        %652 = vmatprep.subr.mxu0 0.0
        %653 = vmatpush1.xpose.msra.mxu0 %v382
        %654 = vmatprep.subr.mxu0 0.0
        %655 = vmatpush1.xpose.msra.mxu0 %v385
        %656 = vmatprep.subr.mxu0 0.0
        %657 = vmatpush1.xpose.msra.mxu0 %v388
        %658 = vmatprep.subr.mxu0 0.0
        %659 = vmatpush1.xpose.msra.mxu0 %v391
        %660 = vmatprep.subr.mxu0 0.0
        %661 = vmatpush1.xpose.msra.mxu0 %v394
        %662 = vmatprep.subr.mxu0 0.0
        %663 = vmatpush1.xpose.msra.mxu0 %v397
        %664 = vmatprep.subr.mxu0 0.0
        %665 = vmatpush1.xpose.msra.mxu0 %v400
        %666 = vmatprep.subr.mxu0 0.0
        %667 = vmatpush1.xpose.msra.mxu0 %v403
        %668 = vmatprep.subr.mxu0 0.0
        %669 = vmatpush1.xpose.msra.mxu0 %v406
        %670 = vmatprep.subr.mxu0 0.0
        %671 = vmatpush1.xpose.msra.mxu0 %v409
        %672 = vmatprep.subr.mxu0 0.0
        %673 = vmatpush1.xpose.msra.mxu0 %v412
        %674 = vmatprep.subr.mxu0 0.0
        %675 = vmatpush1.xpose.msra.mxu0 %v415
        %676 = vmatprep.subr.mxu0 0.0
        %677 = vmatpush1.xpose.msra.mxu0 %v418
        %678 = vmatprep.subr.mxu0 0.0
        %679 = vmatpush1.xpose.msra.mxu0 %v421
        %680 = vmatprep.subr.mxu0 0.0
        %681 = vmatpush1.xpose.msra.mxu0 0.0
        %682 = vmatprep.subr.mxu0 0.0
        %683 = vmatpush1.xpose.msra.mxu0 0.0
        %684 = vmatprep.subr.mxu0 0.0
        %685 = vmatpush1.xpose.msra.mxu0 0.0
        %686 = vmatprep.subr.mxu0 0.0
        %687 = vmatpush1.xpose.msra.mxu0 0.0
        %688 = vmatprep.subr.mxu0 0.0
        %689 = vmatpush1.xpose.msra.mxu0 0.0
        %690 = vmatprep.subr.mxu0 0.0
        %691 = vmatpush1.xpose.msra.mxu0 0.0
        %692 = vmatprep.subr.mxu0 0.0
        %693 = vmatpush1.xpose.msra.mxu0 0.0
        %694 = vmatprep.subr.mxu0 0.0
        %695 = vmatpush1.xpose.msra.mxu0 0.0
        %696 = vmatprep.subr.mxu0 0.0
        %697 = vmatpush1.xpose.msra.mxu0 0.0
        %698 = vmatprep.subr.mxu0 0.0
        %699 = vmatpush1.xpose.msra.mxu0 0.0
        %700 = vmatprep.subr.mxu0 0.0
        %701 = vmatpush1.xpose.msra.mxu0 0.0
        %702 = vmatprep.subr.mxu0 0.0
        %703 = vmatpush1.xpose.msra.mxu0 0.0
        %704 = vmatprep.subr.mxu0 0.0
        %705 = vmatpush1.xpose.msra.mxu0 0.0
        %706 = vmatprep.subr.mxu0 0.0
        %707 = vmatpush1.xpose.msra.mxu0 0.0
        %708 = vmatprep.subr.mxu0 0.0
        %709 = vmatpush1.xpose.msra.mxu0 0.0
        %710 = vmatprep.subr.mxu0 0.0
        %711 = vmatpush1.xpose.msra.mxu0 0.0
        %712 = vmatprep.mubr.f32.mxu0 0.0
        %713 = vmatmul.mubr.f32.gmra.mrb[0].mxu0 %v370
        %v714 = vpop.f32.mrb[0].mxu0
        %v715 = vadd.f32 %v640, %v714
        %v716 = vpop.f32.mrb[0].mxu0
        %717 = vmatprep.mubr.f32.mxu0 0.0
        %718 = vmatmul.mubr.f32.gmra.mrb[0].mxu0 %v373
        %v719 = vpop.f32.mrb[0].mxu0
        %v720 = vadd.f32 %v645, %v719
        %v721 = vpop.f32.mrb[0].mxu0
        %722 = vdwg.mxu0
        %v723 = vadd.f32 %v366, %v715
        %v724 = vadd.f32 %v367, %v720
        %725 = vst [vmem:[#allocation2] sm:$0xff] %v723
        %726 = vst [vmem:[#allocation2 + $0x8] sm:$0xff] %v724
        %v727 = vld [vmem:[#allocation3] sm:$0xff]
        %v728 = vld [vmem:[#allocation3 + $0x8] sm:$0xff]
        %v729 = vmul.f32 %v240, %v240
        %v730 = vmul.f32 %v241, %v241
        %v731 = vmul.f32 %v242, %v242
        %v732 = vmul.f32 %v243, %v243
        %v733 = vmul.f32 %v244, %v244
        %v734 = vmul.f32 %v245, %v245
        %v735 = vmul.f32 %v246, %v246
        %v736 = vmul.f32 %v247, %v247
        %v737 = vmul.f32 %v248, %v248
        %v738 = vmul.f32 %v249, %v249
        %v739 = vmul.f32 %v250, %v250
        %v740 = vmul.f32 %v251, %v251
        %v741 = vmul.f32 %v252, %v252
        %v742 = vmul.f32 %v253, %v253
        %v743 = vadd.f32 %v729, %v730
        %v744 = vadd.f32 %v743, %v731
        %v745 = vadd.f32 %v744, %v732
        %v746 = vadd.f32 %v745, %v733
        %v747 = vadd.f32 %v746, %v734
        %v748 = vsel %vm368, %v735, 0.0
        %v749 = vadd.f32 %v747, %v748
        %750 = vadd.xlane.f32.xlu0 %v749
        %v751 = vpop.xlane.xlu0 %750
        %v752 = vadd.f32 %v736, %v737
        %v753 = vadd.f32 %v752, %v738
        %v754 = vadd.f32 %v753, %v739
        %v755 = vadd.f32 %v754, %v740
        %v756 = vadd.f32 %v755, %v741
        %v757 = vsel %vm368, %v742, 0.0
        %v758 = vadd.f32 %v756, %v757
        %759 = vadd.xlane.f32.xlu0 %v758
        %v760 = vpop.xlane.xlu0 %759
        %v761 = vadd.f32 %v727, %v751
        %v762 = vadd.f32 %v728, %v760
        %vm763 = vcmask 7168
        %764 = vst.msk [vmem:[#allocation3] sm:$0xff] %vm763, %v761
        %765 = vst.msk [vmem:[#allocation3 + $0x8] sm:$0xff] %vm763, %v762
        // Predicated region
        $region41: #{tpu_custom_call.1} parent=35 // pred_check
          %p766 = pneg %p231
        $region42: #{tpu_custom_call.1} parent=35 // pred_check_branch
          %768 = sbr.rel (%p766) target = $region44
        $region43: #{tpu_custom_call.1} parent=35 // pred_region
          %v769 = vld [vmem:[#allocation2] sm:$0xff]
          %v770 = vld [vmem:[#allocation2 + $0x8] sm:$0xff]
          %v771 = vld [vmem:[#allocation3] sm:$0xff]
          %v772 = vld [vmem:[#allocation3 + $0x8] sm:$0xff]
          %v773 = vld [vmem:[%s3] sm:$0x1]
          %775 = vset.pattern.permute.xlu0 0
          %776 = vperm.xlu0 %775, %v771
          %v777 = vpop.permute.xlu0 %776
          %780 = vset.pattern.permute.xlu0 0
          %781 = vperm.xlu0 %780, %v772
          %v782 = vpop.permute.xlu0 %781
          %v785 = vlaneseq
          %v786 = vshrl.u32 %v785, 7
          %v787 = vsub.s32 0, %v786
          %v788 = vrot.slane %v773, %v787
          %v790 = vadd.f32 %v777, %v788
          %v791 = vadd.f32 %v782, %v788
          %v792 = vmul.f32 %v769, 2.0
          %v793 = vmul.f32 %v770, 2.0
          %v794 = vsub.f32 %v790, %v792
          %v795 = vsub.f32 %v791, %v793
          %v796 = vadd.f32 %v794, 1e-05
          %v797 = vadd.f32 %v795, 1e-05
          %v798 = vrcp.pop %v796
          %v799 = vrcp.pop %v797
          %v800 = vmul.f32 %v769, %v769
          %v801 = vmul.f32 %v770, %v770
          %v802 = vmul.f32 %v800, %v798
          %v803 = vmul.f32 %v801, %v799
          %s804 = sld [smem:[#allocation4]]
          %v805 = vstv %s804
          %v806 = vmul.f32 %v802, %v805
          %v807 = vmul.f32 %v803, %v805
          %808 = vst [vmem:[%s217] sm:$0xff] %v806
          %809 = vst [vmem:[%s217 + $0x8] sm:$0xff] %v807
        $region44: #{tpu_custom_call.1} parent=35 // pred_fallthru
          _
        %s810 = sand.u32 %s130, 1
        %s811 = scalar_lea.sflag [#allocation6], %s810
        %s812 = sand.u32 %s130, 1
        %s813 = smul.addr %s812, 16
        %s814 = scalar_lea.vmem [#allocation5], %s813
        // Predicated region
        $region45: #{tpu_custom_call.1} parent=35 // pred_check
          %p815 = pneg %p140
        $region46: #{tpu_custom_call.1} parent=35 // pred_check_branch
          %817 = sbr.rel (%p815) target = $region48
        $region47: #{tpu_custom_call.1} parent=35 // pred_region
          %s818 = smul.u32 2, %s23
          %s820 = ssub.s32 256, 256
          %821 = vsyncadd %s811, %s820
          %s822 = smul.addr %s818, 128
          %s823 = scalar_lea.hbm %s4, %s822
          %s824 = sshll.u32 %s814, 4
          %s825 = int_to_ptr.vmem [resolvable:$true] %s824
          %830 = dma.vmem_to_hbm [thread:$0]  %s825, 256, %s823, %s811, 128, 128, 8
        $region48: #{tpu_custom_call.1} parent=35 // pred_fallthru
          _
      $region36: #{tpu_custom_call.1} parent=5 // pred_fallthru
        _
      %p831 = scmp.le.s32.totalorder 2, %s14
      // Predicated region
      $region49: #{tpu_custom_call.1} parent=5 // pred_check
        %p832 = pneg %p831
      $region50: #{tpu_custom_call.1} parent=5 // pred_check_branch
        %834 = sbr.rel (%p832) target = $region52
      $region51: #{tpu_custom_call.1} parent=5 // pred_region
        %s835 = ssub.s32 %s14, 2
        // Predicated region
        $region53: #{tpu_custom_call.1} parent=51 // pred_check
          %p836 = pneg %p146
        $region54: #{tpu_custom_call.1} parent=51 // pred_check_branch
          %838 = sbr.rel (%p836) target = $region56
        $region55: #{tpu_custom_call.1} parent=51 // pred_region
          %s839 = sand.u32 %s131, 1
          %s840 = scalar_lea.sflag [#allocation6], %s839
          %s841 = sand.u32 %s131, 1
          %s842 = smul.addr %s841, 16
          %s843 = scalar_lea.vmem [#allocation5], %s842
          %844 = dma.done %s840, 256
        $region56: #{tpu_custom_call.1} parent=51 // pred_fallthru
          _
      $region52: #{tpu_custom_call.1} parent=5 // pred_fallthru
        _
    $region6: #{tpu_custom_call.1} parent=1 // loop_footer
      %s18 = sadd.s32 1, %s14
    $region7: #{tpu_custom_call.1} parent=1 // loop_footer_branch
      %13 = sbr.rel target = $region3
    $region8: #{tpu_custom_call.1} parent=1 // loop_exit
      _
    %845 = vsyncpa [#allocation6], 1
    %s846 = scalar_lea.sflag [#allocation6], 1
    %847 = vsyncpa %s846, 1

// kernel: tpu_custom_call.1
$region0: #{tpu_custom_call.1}
  #allocation0 [shape = 'u32[]', space=smem, size = 0x4, offset = 0x4, fixed_abs, tag = 'smem constant byte address 0x4 - core index']
  #allocation1 [shape = 'u32[144,128]{1,0:T(1,128)}', space=vmem, size = 0x12000, scoped, tag = 'internal scratch']
  #allocation2 [shape = 'f32[16,128]{1,0:T(8,128)}', space=vmem, size = 0x2000, scoped, tag = 'scratch operand']
  #allocation3 [shape = 'f32[16,1]{1,0:T(8,128)}', space=vmem, size = 0x2000, scoped, tag = 'scratch operand']
  #allocation4 [shape = 'f32[1]{0:T(128)S(6)}', space=smem, size = 0x200, scoped, tag = 'scoped memory for tpu_custom_call.1']
  %s0 = inlined_call_operand.<no memory space> [shape: f32[1], index: 0, kind: input, shape index: {}]
  %s1 = inlined_call_operand.vmem [shape: f32[32,784], index: 1, kind: input, shape index: {}]
  %s2 = inlined_call_operand.vmem [shape: f32[128,784], index: 2, kind: input, shape index: {}]
  %s3 = inlined_call_operand.vmem [shape: f32[1,128], index: 3, kind: input, shape index: {}]
  %s4 = inlined_call_operand.hbm [shape: f32[32,128], index: 4, kind: output, shape index: {}]
  %s5 = sld [smem:[#allocation0]]
  $region57: #{tpu_custom_call.1} parent=0
    _
  %s7 = ssub.s32 1, %s5
  %s8 = scalar_select 0, %s7, %s5
  %9 = sst [smem:[#allocation4]] %s0
  $region1: #{tpu_custom_call.1} parent=0
    #allocation5 [shape = 'u8[16384]{0}', space=vmem, size = 0x4000, scoped, tag = 'output window, operand 0']
    #allocation6 [shape = 's32[2]{0}', space=sflag, size = 0x8, scoped, tag = 'scoped memory for tpu_custom_call.1']
    %10 = vsyncpa [#allocation6], 0
    %s11 = scalar_lea.sflag [#allocation6], 1
    %12 = vsyncpa %s11, 0
    loop: start=0, step=1, limit=4
    $region2: #{tpu_custom_call.1} parent=1 // loop_pre_header
      _
    $region3: #{tpu_custom_call.1} parent=1 // loop_header
      %s14 = sphi 0, %s18
      %p15 = scmp.ge.s32.totalorder %s14, 4
      %s21 = sphi 0, %s33
      %s22 = sphi 0, %s29
      %s23 = sphi 0, %s21
      %s24 = sphi 0, %s22
      %s25 = sphi 0, %s23
      %s26 = sphi 0, %s24
      %s34 = sphi 0, %s34
      %s36 = sphi 0, %s34
      %s37 = sphi 0, %s36
      %s51 = sphi 0, %s37
      %s59 = sphi 0, %s61
      %s62 = sphi 0, %s59
      %s63 = sphi 0, %s62
      %s79 = sphi 0, %s63
      %s85 = sphi 0, %s87
      %s88 = sphi 0, %s85
      %s89 = sphi 0, %s88
      %s105 = sphi 0, %s89
      %s109 = sphi 0, %s109
      %s111 = sphi 0, %s109
      %s112 = sphi 0, %s111
      %s126 = sphi 0, %s112
      %s132 = sphi 0, %s134
      %s135 = sphi 0, %s132
      %s136 = sphi 0, %s135
      %s152 = sphi 0, %s136
    $region4: #{tpu_custom_call.1} parent=1 // loop_header_branch
      %17 = sbr.rel (%p15) target = $region8
    $region5: #{tpu_custom_call.1} parent=1 // loop_body
      %s19 = ssub.s32 %s14, 1
      %s20 = ssub.s32 %s14, 2
      %s27 = sadd.s32 1, %s22
      %p28 = scmp.ge.s32.totalorder %s27, 1
      %s29 = scalar_select %p28, 0, %s27
      %s30 = sadd.s32 1, %s21
      %s31 = scalar_select %p28, %s30, %s21
      %p32 = scmp.ge.s32.totalorder %s31, 2
      %s33 = scalar_select %p32, 0, %s31
      %s35 = sadd.s32 %s34, 1
      %p38 = scmp.eq.s32.totalorder %s14, 1
      %p39 = scmp.ne.s32.totalorder %s34, %s36
      %p40 = scmp.eq.s32.totalorder %s14, 0
      %p41 = por %p39, %p40
      %p42 = scmp.ne.s32.totalorder %s34, %s36
      %p43 = scmp.eq.s32.totalorder %s19, 1
      %p44 = por %p42, %p43
      %p45 = scmp.ne.s32.totalorder %s36, %s37
      %p46 = scmp.eq.s32.totalorder %s19, 0
      %p47 = por %p45, %p46
      %p48 = scmp.ne.s32.totalorder %s36, %s37
      %p49 = scmp.eq.s32.totalorder %s20, 1
      %p50 = por %p48, %p49
      %p52 = scmp.ne.s32.totalorder %s37, %s51
      %p53 = scmp.eq.s32.totalorder %s20, 0
      %p54 = por %p52, %p53
      %s55 = ssub.s32 %s21, %s33
      %s56 = ssub.s32 %s22, %s29
      %s57 = sor.u32 %s55, %s56
      %p58 = scmp.eq.s32.totalorder %s57, 0
      %s60 = sadd.s32 %s59, 1
      %s61 = scalar_select %p58, %s59, %s60
      %p64 = pneg %p58
      %p65 = scmp.eq.s32.totalorder %s14, 1
      %p66 = por %p64, %p65
      %p67 = scmp.ne.s32.totalorder %s59, %s62
      %p68 = scmp.eq.s32.totalorder %s14, 0
      %p69 = por %p67, %p68
      %p70 = scmp.ne.s32.totalorder %s59, %s62
      %p71 = scmp.eq.s32.totalorder %s19, 1
      %p72 = por %p70, %p71
      %p73 = scmp.ne.s32.totalorder %s62, %s63
      %p74 = scmp.eq.s32.totalorder %s19, 0
      %p75 = por %p73, %p74
      %p76 = scmp.ne.s32.totalorder %s62, %s63
      %p77 = scmp.eq.s32.totalorder %s20, 1
      %p78 = por %p76, %p77
      %p80 = scmp.ne.s32.totalorder %s63, %s79
      %p81 = scmp.eq.s32.totalorder %s20, 0
      %p82 = por %p80, %p81
      %s83 = ssub.s32 %s22, %s29
      %p84 = scmp.eq.s32.totalorder %s83, 0
      %s86 = sadd.s32 %s85, 1
      %s87 = scalar_select %p84, %s85, %s86
      %p90 = pneg %p84
      %p91 = scmp.eq.s32.totalorder %s14, 1
      %p92 = por %p90, %p91
      %p93 = scmp.ne.s32.totalorder %s85, %s88
      %p94 = scmp.eq.s32.totalorder %s14, 0
      %p95 = por %p93, %p94
      %p96 = scmp.ne.s32.totalorder %s85, %s88
      %p97 = scmp.eq.s32.totalorder %s19, 1
      %p98 = por %p96, %p97
      %p99 = scmp.ne.s32.totalorder %s88, %s89
      %p100 = scmp.eq.s32.totalorder %s19, 0
      %p101 = por %p99, %p100
      %p102 = scmp.ne.s32.totalorder %s88, %s89
      %p103 = scmp.eq.s32.totalorder %s20, 1
      %p104 = por %p102, %p103
      %p106 = scmp.ne.s32.totalorder %s89, %s105
      %p107 = scmp.eq.s32.totalorder %s20, 0
      %p108 = por %p106, %p107
      %s110 = sadd.s32 %s109, 1
      %p113 = scmp.eq.s32.totalorder %s14, 1
      %p114 = scmp.ne.s32.totalorder %s109, %s111
      %p115 = scmp.eq.s32.totalorder %s14, 0
      %p116 = por %p114, %p115
      %p117 = scmp.ne.s32.totalorder %s109, %s111
      %p118 = scmp.eq.s32.totalorder %s19, 1
      %p119 = por %p117, %p118
      %p120 = scmp.ne.s32.totalorder %s111, %s112
      %p121 = scmp.eq.s32.totalorder %s19, 0
      %p122 = por %p120, %p121
      %p123 = scmp.ne.s32.totalorder %s111, %s112
      %p124 = scmp.eq.s32.totalorder %s20, 1
      %p125 = por %p123, %p124
      %p127 = scmp.ne.s32.totalorder %s112, %s126
      %p128 = scmp.eq.s32.totalorder %s20, 0
      %p129 = por %p127, %p128
      %s130 = ssub.s32 %s21, %s33
      %p131 = scmp.eq.s32.totalorder %s130, 0
      %s133 = sadd.s32 %s132, 1
      %s134 = scalar_select %p131, %s132, %s133
      %p137 = pneg %p131
      %p138 = scmp.eq.s32.totalorder %s14, 1
      %p139 = por %p137, %p138
      %p140 = scmp.ne.s32.totalorder %s132, %s135
      %p141 = scmp.eq.s32.totalorder %s14, 0
      %p142 = por %p140, %p141
      %p143 = scmp.ne.s32.totalorder %s132, %s135
      %p144 = scmp.eq.s32.totalorder %s19, 1
      %p145 = por %p143, %p144
      %p146 = scmp.ne.s32.totalorder %s135, %s136
      %p147 = scmp.eq.s32.totalorder %s19, 0
      %p148 = por %p146, %p147
      %p149 = scmp.ne.s32.totalorder %s135, %s136
      %p150 = scmp.eq.s32.totalorder %s20, 1
      %p151 = por %p149, %p150
      %p153 = scmp.ne.s32.totalorder %s136, %s152
      %p154 = scmp.eq.s32.totalorder %s20, 0
      %p155 = por %p153, %p154
      %p156 = scmp.le.s32.totalorder 1, %s14
      %p157 = scmp.lt.s32.totalorder %s14, 3
      %p158 = pnand %p156, %p157
      %p159 = pneg %p158
      // Predicated region
      $region9: #{tpu_custom_call.1} parent=5 // pred_check
        _
      $region10: #{tpu_custom_call.1} parent=5 // pred_check_branch
        %161 = sbr.rel (%p158) target = $region12
      $region11: #{tpu_custom_call.1} parent=5 // pred_region
        %s162 = ssub.s32 %s14, 1
        // Predicated region
        $region13: #{tpu_custom_call.1} parent=11 // pred_check
          %p163 = pneg %p47
        $region14: #{tpu_custom_call.1} parent=11 // pred_check_branch
          %165 = sbr.rel (%p163) target = $region16
        $region15: #{tpu_custom_call.1} parent=11 // pred_region
          _
        $region16: #{tpu_custom_call.1} parent=11 // pred_fallthru
          _
        // Predicated region
        $region17: #{tpu_custom_call.1} parent=11 // pred_check
          %p166 = pneg %p101
        $region18: #{tpu_custom_call.1} parent=11 // pred_check_branch
          %168 = sbr.rel (%p166) target = $region20
        $region19: #{tpu_custom_call.1} parent=11 // pred_region
          %s169 = smul.u32 7, %s24
          %p170 = scmp.lt.s32.totalorder %s169, 6
          %s171 = scalar_select %p170, %s169, 6
          %s172 = smul.addr %s171, 8
          %s173 = scalar_lea.vmem %s2, %s172
          %s174 = smul.u32 7, %s24
        $region20: #{tpu_custom_call.1} parent=11 // pred_fallthru
          _
        // Predicated region
        $region21: #{tpu_custom_call.1} parent=11 // pred_check
          %p175 = pneg %p122
        $region22: #{tpu_custom_call.1} parent=11 // pred_check_branch
          %177 = sbr.rel (%p175) target = $region24
        $region23: #{tpu_custom_call.1} parent=11 // pred_region
          _
        $region24: #{tpu_custom_call.1} parent=11 // pred_fallthru
          _
      $region12: #{tpu_custom_call.1} parent=5 // pred_fallthru
        _
      %p178 = scmp.lt.s32.totalorder %s14, 2
      // Predicated region
      $region25: #{tpu_custom_call.1} parent=5 // pred_check
        %p179 = pneg %p178
      $region26: #{tpu_custom_call.1} parent=5 // pred_check_branch
        %181 = sbr.rel (%p179) target = $region28
      $region27: #{tpu_custom_call.1} parent=5 // pred_region
        // Predicated region
        $region29: #{tpu_custom_call.1} parent=27 // pred_check
          %p182 = pneg %p69
        $region30: #{tpu_custom_call.1} parent=27 // pred_check_branch
          %184 = sbr.rel (%p182) target = $region32
        $region31: #{tpu_custom_call.1} parent=27 // pred_region
          %s185 = smul.u32 2, %s21
          %s186 = smul.u32 7, %s22
          %p187 = scmp.lt.s32.totalorder %s185, 3
          %s188 = scalar_select %p187, %s185, 3
          %p189 = scmp.lt.s32.totalorder %s186, 6
          %s190 = scalar_select %p189, %s186, 6
          %s191 = smul.addr %s188, 7
          %s192 = sadd.s32 %s190, %s191
          %s193 = smul.addr %s192, 8
          %s194 = scalar_lea.vmem %s1, %s193
          %s195 = smul.u32 2, %s21
          %s196 = smul.u32 7, %s22
        $region32: #{tpu_custom_call.1} parent=27 // pred_fallthru
          _
      $region28: #{tpu_custom_call.1} parent=5 // pred_fallthru
        _
      %p197 = scmp.le.s32.totalorder 1, %s14
      %p198 = scmp.lt.s32.totalorder %s14, 3
      %p199 = pnand %p197, %p198
      %p200 = pneg %p199
      // Predicated region
      $region33: #{tpu_custom_call.1} parent=5 // pred_check
        _
      $region34: #{tpu_custom_call.1} parent=5 // pred_check_branch
        %202 = sbr.rel (%p199) target = $region36
      $region35: #{tpu_custom_call.1} parent=5 // pred_region
        %s203 = ssub.s32 %s14, 1
        %p204 = pneg %p47
        %p205 = pneg %p44
        %s206 = smul.u32 2, %s23
        %s207 = smul.u32 7, %s24
        %p208 = scmp.lt.s32.totalorder %s206, 3
        %s209 = scalar_select %p208, %s206, 3
        %p210 = scmp.lt.s32.totalorder %s207, 6
        %s211 = scalar_select %p210, %s207, 6
        %s212 = smul.addr %s209, 7
        %s213 = sadd.s32 %s211, %s212
        %s214 = smul.addr %s213, 8
        %s215 = scalar_lea.vmem %s1, %s214
        %p216 = pneg %p75
        %p217 = pneg %p72
        %s218 = smul.u32 7, %s24
        %p219 = scmp.lt.s32.totalorder %s218, 6
        %s220 = scalar_select %p219, %s218, 6
        %s221 = smul.addr %s220, 8
        %s222 = scalar_lea.vmem %s2, %s221
        %p223 = pneg %p101
        %p224 = pneg %p98
        %p225 = pneg %p122
        %p226 = pneg %p119
        %p227 = pneg %p148
        %p228 = pneg %p145
        %s229 = sand.u32 %s135, 1
        %s230 = scalar_lea.sflag [#allocation6], %s229
        %s231 = sand.u32 %s135, 1
        %s232 = smul.addr %s231, 16
        %s233 = scalar_lea.vmem [#allocation5], %s232
        %s234 = smul.u32 2, %s23
        %s235 = smul.u32 7, %s24
        %p236 = scmp.lt.s32.totalorder %s234, 3
        %s237 = scalar_select %p236, %s234, 3
        %p238 = scmp.lt.s32.totalorder %s235, 6
        %s239 = scalar_select %p238, %s235, 6
        %s240 = smul.addr %s237, 7
        %s241 = sadd.s32 %s239, %s240
        %s242 = smul.addr %s241, 8
        %s243 = scalar_lea.vmem %s1, %s242
        %s244 = smul.u32 2, %s23
        %s245 = smul.u32 7, %s24
        %s246 = smul.u32 7, %s24
        %p247 = scmp.lt.s32.totalorder %s246, 6
        %s248 = scalar_select %p247, %s246, 6
        %s249 = smul.addr %s248, 8
        %s250 = scalar_lea.vmem %s2, %s249
        %s251 = smul.u32 7, %s24
        %s252 = smul.u32 2, %s23
        %p253 = scmp.eq.s32.totalorder %s24, 0
        // Predicated region
        $region37: #{tpu_custom_call.1} parent=35 // pred_check
          %p254 = pneg %p253
        $region38: #{tpu_custom_call.1} parent=35 // pred_check_branch
          %256 = sbr.rel (%p254) target = $region40
        $region39: #{tpu_custom_call.1} parent=35 // pred_region
          %257 = vst [vmem:[#allocation2] sm:$0xff] 0.0
          %258 = vst [vmem:[#allocation2 + $0x8] sm:$0xff] 0.0
          %vm259 = vcmask 7168
          %260 = vst.msk [vmem:[#allocation3] sm:$0xff] %vm259, 0.0
          %261 = vst.msk [vmem:[#allocation3 + $0x8] sm:$0xff] %vm259, 0.0
        $region40: #{tpu_custom_call.1} parent=35 // pred_fallthru
          _
        %v262 = vld [vmem:[%s243] sm:$0xff]
        %v263 = vld [vmem:[%s243 + $0x8] sm:$0xff]
        %v264 = vld [vmem:[%s243 + $0x10] sm:$0xff]
        %v265 = vld [vmem:[%s243 + $0x18] sm:$0xff]
        %v266 = vld [vmem:[%s243 + $0x20] sm:$0xff]
        %v267 = vld [vmem:[%s243 + $0x28] sm:$0xff]
        %v268 = vld [vmem:[%s243 + $0x30] sm:$0xff]
        %v269 = vld [vmem:[%s243 + $0x38] sm:$0xff]
        %v270 = vld [vmem:[%s243 + $0x40] sm:$0xff]
        %v271 = vld [vmem:[%s243 + $0x48] sm:$0xff]
        %v272 = vld [vmem:[%s243 + $0x50] sm:$0xff]
        %v273 = vld [vmem:[%s243 + $0x58] sm:$0xff]
        %v274 = vld [vmem:[%s243 + $0x60] sm:$0xff]
        %v275 = vld [vmem:[%s243 + $0x68] sm:$0xff]
        %v276 = vld [vmem:[%s250] sm:$0xff]
        %v277 = vld [vmem:[%s250 + $0x8] sm:$0xff]
        %v278 = vld [vmem:[%s250 + $0x10] sm:$0xff]
        %v279 = vld [vmem:[%s250 + $0x18] sm:$0xff]
        %v280 = vld [vmem:[%s250 + $0x20] sm:$0xff]
        %v281 = vld [vmem:[%s250 + $0x28] sm:$0xff]
        %v282 = vld [vmem:[%s250 + $0x30] sm:$0xff]
        %v283 = vld [vmem:[%s250 + $0x38] sm:$0xff]
        %v284 = vld [vmem:[%s250 + $0x40] sm:$0xff]
        %v285 = vld [vmem:[%s250 + $0x48] sm:$0xff]
        %v286 = vld [vmem:[%s250 + $0x50] sm:$0xff]
        %v287 = vld [vmem:[%s250 + $0x58] sm:$0xff]
        %v288 = vld [vmem:[%s250 + $0x60] sm:$0xff]
        %v289 = vld [vmem:[%s250 + $0x68] sm:$0xff]
        %v290 = vld [vmem:[%s250 + $0x70] sm:$0xff]
        %v291 = vld [vmem:[%s250 + $0x78] sm:$0xff]
        %v292 = vld [vmem:[%s250 + $0x80] sm:$0xff]
        %v293 = vld [vmem:[%s250 + $0x88] sm:$0xff]
        %v294 = vld [vmem:[%s250 + $0x90] sm:$0xff]
        %v295 = vld [vmem:[%s250 + $0x98] sm:$0xff]
        %v296 = vld [vmem:[%s250 + $0xa0] sm:$0xff]
        %v297 = vld [vmem:[%s250 + $0xa8] sm:$0xff]
        %v298 = vld [vmem:[%s250 + $0xb0] sm:$0xff]
        %v299 = vld [vmem:[%s250 + $0xb8] sm:$0xff]
        %v300 = vld [vmem:[%s250 + $0xc0] sm:$0xff]
        %v301 = vld [vmem:[%s250 + $0xc8] sm:$0xff]
        %v302 = vld [vmem:[%s250 + $0xd0] sm:$0xff]
        %v303 = vld [vmem:[%s250 + $0xd8] sm:$0xff]
        %v304 = vld [vmem:[%s250 + $0xe0] sm:$0xff]
        %v305 = vld [vmem:[%s250 + $0xe8] sm:$0xff]
        %v306 = vld [vmem:[%s250 + $0xf0] sm:$0xff]
        %v307 = vld [vmem:[%s250 + $0xf8] sm:$0xff]
        %v308 = vld [vmem:[%s250 + $0x100] sm:$0xff]
        %v309 = vld [vmem:[%s250 + $0x108] sm:$0xff]
        %v310 = vld [vmem:[%s250 + $0x110] sm:$0xff]
        %v311 = vld [vmem:[%s250 + $0x118] sm:$0xff]
        %v312 = vld [vmem:[%s250 + $0x120] sm:$0xff]
        %v313 = vld [vmem:[%s250 + $0x128] sm:$0xff]
        %v314 = vld [vmem:[%s250 + $0x130] sm:$0xff]
        %v315 = vld [vmem:[%s250 + $0x138] sm:$0xff]
        %v316 = vld [vmem:[%s250 + $0x140] sm:$0xff]
        %v317 = vld [vmem:[%s250 + $0x148] sm:$0xff]
        %v318 = vld [vmem:[%s250 + $0x150] sm:$0xff]
        %v319 = vld [vmem:[%s250 + $0x158] sm:$0xff]
        %v320 = vld [vmem:[%s250 + $0x160] sm:$0xff]
        %v321 = vld [vmem:[%s250 + $0x168] sm:$0xff]
        %v322 = vld [vmem:[%s250 + $0x170] sm:$0xff]
        %v323 = vld [vmem:[%s250 + $0x178] sm:$0xff]
        %v324 = vld [vmem:[%s250 + $0x180] sm:$0xff]
        %v325 = vld [vmem:[%s250 + $0x188] sm:$0xff]
        %v326 = vld [vmem:[%s250 + $0x190] sm:$0xff]
        %v327 = vld [vmem:[%s250 + $0x198] sm:$0xff]
        %v328 = vld [vmem:[%s250 + $0x1a0] sm:$0xff]
        %v329 = vld [vmem:[%s250 + $0x1a8] sm:$0xff]
        %v330 = vld [vmem:[%s250 + $0x1b0] sm:$0xff]
        %v331 = vld [vmem:[%s250 + $0x1b8] sm:$0xff]
        %v332 = vld [vmem:[%s250 + $0x1c0] sm:$0xff]
        %v333 = vld [vmem:[%s250 + $0x1c8] sm:$0xff]
        %v334 = vld [vmem:[%s250 + $0x1d0] sm:$0xff]
        %v335 = vld [vmem:[%s250 + $0x1d8] sm:$0xff]
        %v336 = vld [vmem:[%s250 + $0x1e0] sm:$0xff]
        %v337 = vld [vmem:[%s250 + $0x1e8] sm:$0xff]
        %v338 = vld [vmem:[%s250 + $0x1f0] sm:$0xff]
        %v339 = vld [vmem:[%s250 + $0x1f8] sm:$0xff]
        %v340 = vld [vmem:[%s250 + $0x200] sm:$0xff]
        %v341 = vld [vmem:[%s250 + $0x208] sm:$0xff]
        %v342 = vld [vmem:[%s250 + $0x210] sm:$0xff]
        %v343 = vld [vmem:[%s250 + $0x218] sm:$0xff]
        %v344 = vld [vmem:[%s250 + $0x220] sm:$0xff]
        %v345 = vld [vmem:[%s250 + $0x228] sm:$0xff]
        %v346 = vld [vmem:[%s250 + $0x230] sm:$0xff]
        %v347 = vld [vmem:[%s250 + $0x238] sm:$0xff]
        %v348 = vld [vmem:[%s250 + $0x240] sm:$0xff]
        %v349 = vld [vmem:[%s250 + $0x248] sm:$0xff]
        %v350 = vld [vmem:[%s250 + $0x250] sm:$0xff]
        %v351 = vld [vmem:[%s250 + $0x258] sm:$0xff]
        %v352 = vld [vmem:[%s250 + $0x260] sm:$0xff]
        %v353 = vld [vmem:[%s250 + $0x268] sm:$0xff]
        %v354 = vld [vmem:[%s250 + $0x270] sm:$0xff]
        %v355 = vld [vmem:[%s250 + $0x278] sm:$0xff]
        %v356 = vld [vmem:[%s250 + $0x280] sm:$0xff]
        %v357 = vld [vmem:[%s250 + $0x288] sm:$0xff]
        %v358 = vld [vmem:[%s250 + $0x290] sm:$0xff]
        %v359 = vld [vmem:[%s250 + $0x298] sm:$0xff]
        %v360 = vld [vmem:[%s250 + $0x2a0] sm:$0xff]
        %v361 = vld [vmem:[%s250 + $0x2a8] sm:$0xff]
        %v362 = vld [vmem:[%s250 + $0x2b0] sm:$0xff]
        %v363 = vld [vmem:[%s250 + $0x2b8] sm:$0xff]
        %v364 = vld [vmem:[%s250 + $0x2c0] sm:$0xff]
        %v365 = vld [vmem:[%s250 + $0x2c8] sm:$0xff]
        %v366 = vld [vmem:[%s250 + $0x2d0] sm:$0xff]
        %v367 = vld [vmem:[%s250 + $0x2d8] sm:$0xff]
        %v368 = vld [vmem:[%s250 + $0x2e0] sm:$0xff]
        %v369 = vld [vmem:[%s250 + $0x2e8] sm:$0xff]
        %v370 = vld [vmem:[%s250 + $0x2f0] sm:$0xff]
        %v371 = vld [vmem:[%s250 + $0x2f8] sm:$0xff]
        %v372 = vld [vmem:[%s250 + $0x300] sm:$0xff]
        %v373 = vld [vmem:[%s250 + $0x308] sm:$0xff]
        %v374 = vld [vmem:[%s250 + $0x310] sm:$0xff]
        %v375 = vld [vmem:[%s250 + $0x318] sm:$0xff]
        %v376 = vld [vmem:[%s250 + $0x320] sm:$0xff]
        %v377 = vld [vmem:[%s250 + $0x328] sm:$0xff]
        %v378 = vld [vmem:[%s250 + $0x330] sm:$0xff]
        %v379 = vld [vmem:[%s250 + $0x338] sm:$0xff]
        %v380 = vld [vmem:[%s250 + $0x340] sm:$0xff]
        %v381 = vld [vmem:[%s250 + $0x348] sm:$0xff]
        %v382 = vld [vmem:[%s250 + $0x350] sm:$0xff]
        %v383 = vld [vmem:[%s250 + $0x358] sm:$0xff]
        %v384 = vld [vmem:[%s250 + $0x360] sm:$0xff]
        %v385 = vld [vmem:[%s250 + $0x368] sm:$0xff]
        %v386 = vld [vmem:[%s250 + $0x370] sm:$0xff]
        %v387 = vld [vmem:[%s250 + $0x378] sm:$0xff]
        %v388 = vld [vmem:[#allocation2] sm:$0xff]
        %v389 = vld [vmem:[#allocation2 + $0x8] sm:$0xff]
        %vm390 = vcmask 130048
        %v392 = vsel %vm390, %v268, 0
        %v395 = vsel %vm390, %v275, 0
        %v398 = vsel %vm390, %v282, 0
        %v401 = vsel %vm390, %v289, 0
        %v404 = vsel %vm390, %v296, 0
        %v407 = vsel %vm390, %v303, 0
        %v410 = vsel %vm390, %v310, 0
        %v413 = vsel %vm390, %v317, 0
        %v416 = vsel %vm390, %v324, 0
        %v419 = vsel %vm390, %v331, 0
        %v422 = vsel %vm390, %v338, 0
        %v425 = vsel %vm390, %v345, 0
        %v428 = vsel %vm390, %v352, 0
        %v431 = vsel %vm390, %v359, 0
        %v434 = vsel %vm390, %v366, 0
        %v437 = vsel %vm390, %v373, 0
        %v440 = vsel %vm390, %v380, 0
        %v443 = vsel %vm390, %v387, 0
        %445 = vmatprep.subr.mxu0 %v277
        %446 = vmatpush1.xpose.msra.mxu0 %v276
        %447 = vmatprep.subr.mxu0 %v284
        %448 = vmatpush1.xpose.msra.mxu0 %v283
        %449 = vmatprep.subr.mxu0 %v291
        %450 = vmatpush1.xpose.msra.mxu0 %v290
        %451 = vmatprep.subr.mxu0 %v298
        %452 = vmatpush1.xpose.msra.mxu0 %v297
        %453 = vmatprep.subr.mxu0 %v305
        %454 = vmatpush1.xpose.msra.mxu0 %v304
        %455 = vmatprep.subr.mxu0 %v312
        %456 = vmatpush1.xpose.msra.mxu0 %v311
        %457 = vmatprep.subr.mxu0 %v319
        %458 = vmatpush1.xpose.msra.mxu0 %v318
        %459 = vmatprep.subr.mxu0 %v326
        %460 = vmatpush1.xpose.msra.mxu0 %v325
        %461 = vmatprep.subr.mxu0 %v333
        %462 = vmatpush1.xpose.msra.mxu0 %v332
        %463 = vmatprep.subr.mxu0 %v340
        %464 = vmatpush1.xpose.msra.mxu0 %v339
        %465 = vmatprep.subr.mxu0 %v347
        %466 = vmatpush1.xpose.msra.mxu0 %v346
        %467 = vmatprep.subr.mxu0 %v354
        %468 = vmatpush1.xpose.msra.mxu0 %v353
        %469 = vmatprep.subr.mxu0 %v361
        %470 = vmatpush1.xpose.msra.mxu0 %v360
        %471 = vmatprep.subr.mxu0 %v368
        %472 = vmatpush1.xpose.msra.mxu0 %v367
        %473 = vmatprep.subr.mxu0 %v375
        %474 = vmatpush1.xpose.msra.mxu0 %v374
        %475 = vmatprep.subr.mxu0 %v382
        %476 = vmatpush1.xpose.msra.mxu0 %v381
        %477 = vmatprep.subr.mxu0 0.0
        %478 = vmatpush1.xpose.msra.mxu0 0.0
        %479 = vmatprep.subr.mxu0 0.0
        %480 = vmatpush1.xpose.msra.mxu0 0.0
        %481 = vmatprep.subr.mxu0 0.0
        %482 = vmatpush1.xpose.msra.mxu0 0.0
        %483 = vmatprep.subr.mxu0 0.0
        %484 = vmatpush1.xpose.msra.mxu0 0.0
        %485 = vmatprep.subr.mxu0 0.0
        %486 = vmatpush1.xpose.msra.mxu0 0.0
        %487 = vmatprep.subr.mxu0 0.0
        %488 = vmatpush1.xpose.msra.mxu0 0.0
        %489 = vmatprep.subr.mxu0 0.0
        %490 = vmatpush1.xpose.msra.mxu0 0.0
        %491 = vmatprep.subr.mxu0 0.0
        %492 = vmatpush1.xpose.msra.mxu0 0.0
        %493 = vmatprep.subr.mxu0 0.0
        %494 = vmatpush1.xpose.msra.mxu0 0.0
        %495 = vmatprep.subr.mxu0 0.0
        %496 = vmatpush1.xpose.msra.mxu0 0.0
        %497 = vmatprep.subr.mxu0 0.0
        %498 = vmatpush1.xpose.msra.mxu0 0.0
        %499 = vmatprep.subr.mxu0 0.0
        %500 = vmatpush1.xpose.msra.mxu0 0.0
        %501 = vmatprep.subr.mxu0 0.0
        %502 = vmatpush1.xpose.msra.mxu0 0.0
        %503 = vmatprep.subr.mxu0 0.0
        %504 = vmatpush1.xpose.msra.mxu0 0.0
        %505 = vmatprep.subr.mxu0 0.0
        %506 = vmatpush1.xpose.msra.mxu0 0.0
        %507 = vmatprep.subr.mxu0 0.0
        %508 = vmatpush1.xpose.msra.mxu0 0.0
        %509 = vmatprep.mubr.f32.mxu0 %v263
        %510 = vmatmul.mubr.f32.gmra.mrb[0].mxu0 %v262
        %v511 = vpop.f32.mrb[0].mxu0
        %v512 = vadd.f32 0.0, %v511
        %v513 = vpop.f32.mrb[0].mxu0
        %514 = vmatprep.mubr.f32.mxu0 %v270
        %515 = vmatmul.mubr.f32.gmra.mrb[0].mxu0 %v269
        %v516 = vpop.f32.mrb[0].mxu0
        %v517 = vadd.f32 0.0, %v516
        %v518 = vpop.f32.mrb[0].mxu0
        %519 = vdwg.mxu0
        %520 = vmatprep.subr.mxu0 %v279
        %521 = vmatpush1.xpose.msra.mxu0 %v278
        %522 = vmatprep.subr.mxu0 %v286
        %523 = vmatpush1.xpose.msra.mxu0 %v285
        %524 = vmatprep.subr.mxu0 %v293
        %525 = vmatpush1.xpose.msra.mxu0 %v292
        %526 = vmatprep.subr.mxu0 %v300
        %527 = vmatpush1.xpose.msra.mxu0 %v299
        %528 = vmatprep.subr.mxu0 %v307
        %529 = vmatpush1.xpose.msra.mxu0 %v306
        %530 = vmatprep.subr.mxu0 %v314
        %531 = vmatpush1.xpose.msra.mxu0 %v313
        %532 = vmatprep.subr.mxu0 %v321
        %533 = vmatpush1.xpose.msra.mxu0 %v320
        %534 = vmatprep.subr.mxu0 %v328
        %535 = vmatpush1.xpose.msra.mxu0 %v327
        %536 = vmatprep.subr.mxu0 %v335
        %537 = vmatpush1.xpose.msra.mxu0 %v334
        %538 = vmatprep.subr.mxu0 %v342
        %539 = vmatpush1.xpose.msra.mxu0 %v341
        %540 = vmatprep.subr.mxu0 %v349
        %541 = vmatpush1.xpose.msra.mxu0 %v348
        %542 = vmatprep.subr.mxu0 %v356
        %543 = vmatpush1.xpose.msra.mxu0 %v355
        %544 = vmatprep.subr.mxu0 %v363
        %545 = vmatpush1.xpose.msra.mxu0 %v362
        %546 = vmatprep.subr.mxu0 %v370
        %547 = vmatpush1.xpose.msra.mxu0 %v369
        %548 = vmatprep.subr.mxu0 %v377
        %549 = vmatpush1.xpose.msra.mxu0 %v376
        %550 = vmatprep.subr.mxu0 %v384
        %551 = vmatpush1.xpose.msra.mxu0 %v383
        %552 = vmatprep.subr.mxu0 0.0
        %553 = vmatpush1.xpose.msra.mxu0 0.0
        %554 = vmatprep.subr.mxu0 0.0
        %555 = vmatpush1.xpose.msra.mxu0 0.0
        %556 = vmatprep.subr.mxu0 0.0
        %557 = vmatpush1.xpose.msra.mxu0 0.0
        %558 = vmatprep.subr.mxu0 0.0
        %559 = vmatpush1.xpose.msra.mxu0 0.0
        %560 = vmatprep.subr.mxu0 0.0
        %561 = vmatpush1.xpose.msra.mxu0 0.0
        %562 = vmatprep.subr.mxu0 0.0
        %563 = vmatpush1.xpose.msra.mxu0 0.0
        %564 = vmatprep.subr.mxu0 0.0
        %565 = vmatpush1.xpose.msra.mxu0 0.0
        %566 = vmatprep.subr.mxu0 0.0
        %567 = vmatpush1.xpose.msra.mxu0 0.0
        %568 = vmatprep.subr.mxu0 0.0
        %569 = vmatpush1.xpose.msra.mxu0 0.0
        %570 = vmatprep.subr.mxu0 0.0
        %571 = vmatpush1.xpose.msra.mxu0 0.0
        %572 = vmatprep.subr.mxu0 0.0
        %573 = vmatpush1.xpose.msra.mxu0 0.0
        %574 = vmatprep.subr.mxu0 0.0
        %575 = vmatpush1.xpose.msra.mxu0 0.0
        %576 = vmatprep.subr.mxu0 0.0
        %577 = vmatpush1.xpose.msra.mxu0 0.0
        %578 = vmatprep.subr.mxu0 0.0
        %579 = vmatpush1.xpose.msra.mxu0 0.0
        %580 = vmatprep.subr.mxu0 0.0
        %581 = vmatpush1.xpose.msra.mxu0 0.0
        %582 = vmatprep.subr.mxu0 0.0
        %583 = vmatpush1.xpose.msra.mxu0 0.0
        %584 = vmatprep.mubr.f32.mxu0 %v265
        %585 = vmatmul.mubr.f32.gmra.mrb[0].mxu0 %v264
        %v586 = vpop.f32.mrb[0].mxu0
        %v587 = vadd.f32 %v512, %v586
        %v588 = vpop.f32.mrb[0].mxu0
        %589 = vmatprep.mubr.f32.mxu0 %v272
        %590 = vmatmul.mubr.f32.gmra.mrb[0].mxu0 %v271
        %v591 = vpop.f32.mrb[0].mxu0
        %v592 = vadd.f32 %v517, %v591
        %v593 = vpop.f32.mrb[0].mxu0
        %594 = vdwg.mxu0
        %595 = vmatprep.subr.mxu0 %v281
        %596 = vmatpush1.xpose.msra.mxu0 %v280
        %597 = vmatprep.subr.mxu0 %v288
        %598 = vmatpush1.xpose.msra.mxu0 %v287
        %599 = vmatprep.subr.mxu0 %v295
        %600 = vmatpush1.xpose.msra.mxu0 %v294
        %601 = vmatprep.subr.mxu0 %v302
        %602 = vmatpush1.xpose.msra.mxu0 %v301
        %603 = vmatprep.subr.mxu0 %v309
        %604 = vmatpush1.xpose.msra.mxu0 %v308
        %605 = vmatprep.subr.mxu0 %v316
        %606 = vmatpush1.xpose.msra.mxu0 %v315
        %607 = vmatprep.subr.mxu0 %v323
        %608 = vmatpush1.xpose.msra.mxu0 %v322
        %609 = vmatprep.subr.mxu0 %v330
        %610 = vmatpush1.xpose.msra.mxu0 %v329
        %611 = vmatprep.subr.mxu0 %v337
        %612 = vmatpush1.xpose.msra.mxu0 %v336
        %613 = vmatprep.subr.mxu0 %v344
        %614 = vmatpush1.xpose.msra.mxu0 %v343
        %615 = vmatprep.subr.mxu0 %v351
        %616 = vmatpush1.xpose.msra.mxu0 %v350
        %617 = vmatprep.subr.mxu0 %v358
        %618 = vmatpush1.xpose.msra.mxu0 %v357
        %619 = vmatprep.subr.mxu0 %v365
        %620 = vmatpush1.xpose.msra.mxu0 %v364
        %621 = vmatprep.subr.mxu0 %v372
        %622 = vmatpush1.xpose.msra.mxu0 %v371
        %623 = vmatprep.subr.mxu0 %v379
        %624 = vmatpush1.xpose.msra.mxu0 %v378
        %625 = vmatprep.subr.mxu0 %v386
        %626 = vmatpush1.xpose.msra.mxu0 %v385
        %627 = vmatprep.subr.mxu0 0.0
        %628 = vmatpush1.xpose.msra.mxu0 0.0
        %629 = vmatprep.subr.mxu0 0.0
        %630 = vmatpush1.xpose.msra.mxu0 0.0
        %631 = vmatprep.subr.mxu0 0.0
        %632 = vmatpush1.xpose.msra.mxu0 0.0
        %633 = vmatprep.subr.mxu0 0.0
        %634 = vmatpush1.xpose.msra.mxu0 0.0
        %635 = vmatprep.subr.mxu0 0.0
        %636 = vmatpush1.xpose.msra.mxu0 0.0
        %637 = vmatprep.subr.mxu0 0.0
        %638 = vmatpush1.xpose.msra.mxu0 0.0
        %639 = vmatprep.subr.mxu0 0.0
        %640 = vmatpush1.xpose.msra.mxu0 0.0
        %641 = vmatprep.subr.mxu0 0.0
        %642 = vmatpush1.xpose.msra.mxu0 0.0
        %643 = vmatprep.subr.mxu0 0.0
        %644 = vmatpush1.xpose.msra.mxu0 0.0
        %645 = vmatprep.subr.mxu0 0.0
        %646 = vmatpush1.xpose.msra.mxu0 0.0
        %647 = vmatprep.subr.mxu0 0.0
        %648 = vmatpush1.xpose.msra.mxu0 0.0
        %649 = vmatprep.subr.mxu0 0.0
        %650 = vmatpush1.xpose.msra.mxu0 0.0
        %651 = vmatprep.subr.mxu0 0.0
        %652 = vmatpush1.xpose.msra.mxu0 0.0
        %653 = vmatprep.subr.mxu0 0.0
        %654 = vmatpush1.xpose.msra.mxu0 0.0
        %655 = vmatprep.subr.mxu0 0.0
        %656 = vmatpush1.xpose.msra.mxu0 0.0
        %657 = vmatprep.subr.mxu0 0.0
        %658 = vmatpush1.xpose.msra.mxu0 0.0
        %659 = vmatprep.mubr.f32.mxu0 %v267
        %660 = vmatmul.mubr.f32.gmra.mrb[0].mxu0 %v266
        %v661 = vpop.f32.mrb[0].mxu0
        %v662 = vadd.f32 %v587, %v661
        %v663 = vpop.f32.mrb[0].mxu0
        %664 = vmatprep.mubr.f32.mxu0 %v274
        %665 = vmatmul.mubr.f32.gmra.mrb[0].mxu0 %v273
        %v666 = vpop.f32.mrb[0].mxu0
        %v667 = vadd.f32 %v592, %v666
        %v668 = vpop.f32.mrb[0].mxu0
        %669 = vdwg.mxu0
        %670 = vmatprep.subr.mxu0 0.0
        %671 = vmatpush1.xpose.msra.mxu0 %v398
        %672 = vmatprep.subr.mxu0 0.0
        %673 = vmatpush1.xpose.msra.mxu0 %v401
        %674 = vmatprep.subr.mxu0 0.0
        %675 = vmatpush1.xpose.msra.mxu0 %v404
        %676 = vmatprep.subr.mxu0 0.0
        %677 = vmatpush1.xpose.msra.mxu0 %v407
        %678 = vmatprep.subr.mxu0 0.0
        %679 = vmatpush1.xpose.msra.mxu0 %v410
        %680 = vmatprep.subr.mxu0 0.0
        %681 = vmatpush1.xpose.msra.mxu0 %v413
        %682 = vmatprep.subr.mxu0 0.0
        %683 = vmatpush1.xpose.msra.mxu0 %v416
        %684 = vmatprep.subr.mxu0 0.0
        %685 = vmatpush1.xpose.msra.mxu0 %v419
        %686 = vmatprep.subr.mxu0 0.0
        %687 = vmatpush1.xpose.msra.mxu0 %v422
        %688 = vmatprep.subr.mxu0 0.0
        %689 = vmatpush1.xpose.msra.mxu0 %v425
        %690 = vmatprep.subr.mxu0 0.0
        %691 = vmatpush1.xpose.msra.mxu0 %v428
        %692 = vmatprep.subr.mxu0 0.0
        %693 = vmatpush1.xpose.msra.mxu0 %v431
        %694 = vmatprep.subr.mxu0 0.0
        %695 = vmatpush1.xpose.msra.mxu0 %v434
        %696 = vmatprep.subr.mxu0 0.0
        %697 = vmatpush1.xpose.msra.mxu0 %v437
        %698 = vmatprep.subr.mxu0 0.0
        %699 = vmatpush1.xpose.msra.mxu0 %v440
        %700 = vmatprep.subr.mxu0 0.0
        %701 = vmatpush1.xpose.msra.mxu0 %v443
        %702 = vmatprep.subr.mxu0 0.0
        %703 = vmatpush1.xpose.msra.mxu0 0.0
        %704 = vmatprep.subr.mxu0 0.0
        %705 = vmatpush1.xpose.msra.mxu0 0.0
        %706 = vmatprep.subr.mxu0 0.0
        %707 = vmatpush1.xpose.msra.mxu0 0.0
        %708 = vmatprep.subr.mxu0 0.0
        %709 = vmatpush1.xpose.msra.mxu0 0.0
        %710 = vmatprep.subr.mxu0 0.0
        %711 = vmatpush1.xpose.msra.mxu0 0.0
        %712 = vmatprep.subr.mxu0 0.0
        %713 = vmatpush1.xpose.msra.mxu0 0.0
        %714 = vmatprep.subr.mxu0 0.0
        %715 = vmatpush1.xpose.msra.mxu0 0.0
        %716 = vmatprep.subr.mxu0 0.0
        %717 = vmatpush1.xpose.msra.mxu0 0.0
        %718 = vmatprep.subr.mxu0 0.0
        %719 = vmatpush1.xpose.msra.mxu0 0.0
        %720 = vmatprep.subr.mxu0 0.0
        %721 = vmatpush1.xpose.msra.mxu0 0.0
        %722 = vmatprep.subr.mxu0 0.0
        %723 = vmatpush1.xpose.msra.mxu0 0.0
        %724 = vmatprep.subr.mxu0 0.0
        %725 = vmatpush1.xpose.msra.mxu0 0.0
        %726 = vmatprep.subr.mxu0 0.0
        %727 = vmatpush1.xpose.msra.mxu0 0.0
        %728 = vmatprep.subr.mxu0 0.0
        %729 = vmatpush1.xpose.msra.mxu0 0.0
        %730 = vmatprep.subr.mxu0 0.0
        %731 = vmatpush1.xpose.msra.mxu0 0.0
        %732 = vmatprep.subr.mxu0 0.0
        %733 = vmatpush1.xpose.msra.mxu0 0.0
        %734 = vmatprep.mubr.f32.mxu0 0.0
        %735 = vmatmul.mubr.f32.gmra.mrb[0].mxu0 %v392
        %v736 = vpop.f32.mrb[0].mxu0
        %v737 = vadd.f32 %v662, %v736
        %v738 = vpop.f32.mrb[0].mxu0
        %739 = vmatprep.mubr.f32.mxu0 0.0
        %740 = vmatmul.mubr.f32.gmra.mrb[0].mxu0 %v395
        %v741 = vpop.f32.mrb[0].mxu0
        %v742 = vadd.f32 %v667, %v741
        %v743 = vpop.f32.mrb[0].mxu0
        %744 = vdwg.mxu0
        %v745 = vadd.f32 %v388, %v737
        %v746 = vadd.f32 %v389, %v742
        %747 = vst [vmem:[#allocation2] sm:$0xff] %v745
        %748 = vst [vmem:[#allocation2 + $0x8] sm:$0xff] %v746
        %v749 = vld [vmem:[#allocation3] sm:$0xff]
        %v750 = vld [vmem:[#allocation3 + $0x8] sm:$0xff]
        %v751 = vmul.f32 %v262, %v262
        %v752 = vmul.f32 %v263, %v263
        %v753 = vmul.f32 %v264, %v264
        %v754 = vmul.f32 %v265, %v265
        %v755 = vmul.f32 %v266, %v266
        %v756 = vmul.f32 %v267, %v267
        %v757 = vmul.f32 %v268, %v268
        %v758 = vmul.f32 %v269, %v269
        %v759 = vmul.f32 %v270, %v270
        %v760 = vmul.f32 %v271, %v271
        %v761 = vmul.f32 %v272, %v272
        %v762 = vmul.f32 %v273, %v273
        %v763 = vmul.f32 %v274, %v274
        %v764 = vmul.f32 %v275, %v275
        %v765 = vadd.f32 %v751, %v752
        %v766 = vadd.f32 %v765, %v753
        %v767 = vadd.f32 %v766, %v754
        %v768 = vadd.f32 %v767, %v755
        %v769 = vadd.f32 %v768, %v756
        %v770 = vsel %vm390, %v757, 0.0
        %v771 = vadd.f32 %v769, %v770
        %772 = vadd.xlane.f32.xlu0 %v771
        %v773 = vpop.xlane.xlu0 %772
        %v774 = vadd.f32 %v758, %v759
        %v775 = vadd.f32 %v774, %v760
        %v776 = vadd.f32 %v775, %v761
        %v777 = vadd.f32 %v776, %v762
        %v778 = vadd.f32 %v777, %v763
        %v779 = vsel %vm390, %v764, 0.0
        %v780 = vadd.f32 %v778, %v779
        %781 = vadd.xlane.f32.xlu0 %v780
        %v782 = vpop.xlane.xlu0 %781
        %v783 = vadd.f32 %v749, %v773
        %v784 = vadd.f32 %v750, %v782
        %vm785 = vcmask 7168
        %786 = vst.msk [vmem:[#allocation3] sm:$0xff] %vm785, %v783
        %787 = vst.msk [vmem:[#allocation3 + $0x8] sm:$0xff] %vm785, %v784
        // Predicated region
        $region41: #{tpu_custom_call.1} parent=35 // pred_check
          %p788 = pneg %p253
        $region42: #{tpu_custom_call.1} parent=35 // pred_check_branch
          %790 = sbr.rel (%p788) target = $region44
        $region43: #{tpu_custom_call.1} parent=35 // pred_region
          %v791 = vld [vmem:[#allocation2] sm:$0xff]
          %v792 = vld [vmem:[#allocation2 + $0x8] sm:$0xff]
          %v793 = vld [vmem:[#allocation3] sm:$0xff]
          %v794 = vld [vmem:[#allocation3 + $0x8] sm:$0xff]
          %v795 = vld [vmem:[%s3] sm:$0x1]
          %797 = vset.pattern.permute.xlu0 0
          %798 = vperm.xlu0 %797, %v793
          %v799 = vpop.permute.xlu0 %798
          %802 = vset.pattern.permute.xlu0 0
          %803 = vperm.xlu0 %802, %v794
          %v804 = vpop.permute.xlu0 %803
          %v807 = vlaneseq
          %v808 = vshrl.u32 %v807, 7
          %v809 = vsub.s32 0, %v808
          %v810 = vrot.slane %v795, %v809
          %v812 = vadd.f32 %v799, %v810
          %v813 = vadd.f32 %v804, %v810
          %v814 = vmul.f32 %v791, 2.0
          %v815 = vmul.f32 %v792, 2.0
          %v816 = vsub.f32 %v812, %v814
          %v817 = vsub.f32 %v813, %v815
          %v818 = vadd.f32 %v816, 1e-05
          %v819 = vadd.f32 %v817, 1e-05
          %v820 = vrcp.pop %v818
          %v821 = vrcp.pop %v819
          %v822 = vmul.f32 %v791, %v791
          %v823 = vmul.f32 %v792, %v792
          %v824 = vmul.f32 %v822, %v820
          %v825 = vmul.f32 %v823, %v821
          %s826 = sld [smem:[#allocation4]]
          %v827 = vstv %s826
          %v828 = vmul.f32 %v824, %v827
          %v829 = vmul.f32 %v825, %v827
          %830 = vst [vmem:[%s233] sm:$0xff] %v828
          %831 = vst [vmem:[%s233 + $0x8] sm:$0xff] %v829
        $region44: #{tpu_custom_call.1} parent=35 // pred_fallthru
          _
        %s832 = sand.u32 %s135, 1
        %s833 = scalar_lea.sflag [#allocation6], %s832
        %s834 = sand.u32 %s135, 1
        %s835 = smul.addr %s834, 16
        %s836 = scalar_lea.vmem [#allocation5], %s835
        // Predicated region
        $region45: #{tpu_custom_call.1} parent=35 // pred_check
          %p837 = pneg %p145
        $region46: #{tpu_custom_call.1} parent=35 // pred_check_branch
          %839 = sbr.rel (%p837) target = $region48
        $region47: #{tpu_custom_call.1} parent=35 // pred_region
          %s840 = smul.u32 2, %s23
          %s842 = ssub.s32 256, 256
          %843 = vsyncadd %s833, %s842
          %s844 = smul.addr %s840, 128
          %s845 = scalar_lea.hbm %s4, %s844
          %s846 = sshll.u32 %s836, 4
          %s847 = int_to_ptr.vmem [resolvable:$true] %s846
          %852 = dma.vmem_to_hbm [thread:$0]  %s847, 256, %s845, %s833, 128, 128, 8
        $region48: #{tpu_custom_call.1} parent=35 // pred_fallthru
          _
      $region36: #{tpu_custom_call.1} parent=5 // pred_fallthru
        _
      %p853 = scmp.le.s32.totalorder 2, %s14
      // Predicated region
      $region49: #{tpu_custom_call.1} parent=5 // pred_check
        %p854 = pneg %p853
      $region50: #{tpu_custom_call.1} parent=5 // pred_check_branch
        %856 = sbr.rel (%p854) target = $region52
      $region51: #{tpu_custom_call.1} parent=5 // pred_region
        %s857 = ssub.s32 %s14, 2
        // Predicated region
        $region53: #{tpu_custom_call.1} parent=51 // pred_check
          %p858 = pneg %p151
        $region54: #{tpu_custom_call.1} parent=51 // pred_check_branch
          %860 = sbr.rel (%p858) target = $region56
        $region55: #{tpu_custom_call.1} parent=51 // pred_region
          %s861 = sand.u32 %s136, 1
          %s862 = scalar_lea.sflag [#allocation6], %s861
          %s863 = sand.u32 %s136, 1
          %s864 = smul.addr %s863, 16
          %s865 = scalar_lea.vmem [#allocation5], %s864
          %866 = dma.done %s862, 256
        $region56: #{tpu_custom_call.1} parent=51 // pred_fallthru
          _
      $region52: #{tpu_custom_call.1} parent=5 // pred_fallthru
        _
    $region6: #{tpu_custom_call.1} parent=1 // loop_footer
      %s18 = sadd.s32 1, %s14
    $region7: #{tpu_custom_call.1} parent=1 // loop_footer_branch
      %13 = sbr.rel target = $region3
    $region8: #{tpu_custom_call.1} parent=1 // loop_exit
      _
    %867 = vsyncpa [#allocation6], 1
    %s868 = scalar_lea.sflag [#allocation6], 1
    %869 = vsyncpa %s868, 1

</llo_original>
